<compile_context>
chip_gen: v6e
topology: v6e:2x2x1
jax: 0.10.0
libtpu: 0.0.40
codegen_flags: <defaults>
</compile_context>

<pallas_src>
import functools

import jax
import jax.numpy as jnp
from jax import lax
from jax.experimental import pallas as pl
from jax.experimental.pallas import tpu as pltpu


def _cdiv(a, b):
    return (a + b - 1) // b


# ----------------------------- Pallas kernel --------------------------------
def _conv_ln_kernel(*refs, th, w_out, n_a, n_b, n_hidden, ssc, eps):
    """Fused overlap-patch conv + bias + LayerNorm for one (batch, row-tile).

    refs layout:
      x_main_ref : (th, Wr, s*s*C)            phase-folded input rows of this tile
      halo refs  : (n_a-1) x (1, Wr, s*s*C)   overlapping rows owned by next tile
      w_ref      : (n_a*n_b, s*s*C, N)        packed conv weight (zero-padded taps)
      b_ref/g_ref/beta_ref : (1, N)           conv bias / LN weight / LN bias (f32)
      o_ref      : (th*W_out, N)              output block (contiguous in HBM)
      acc_ref    : (th*W_out, N) f32          VMEM scratch accumulator
    """
    n_halo = n_a - 1
    x_main_ref = refs[0]
    halo_refs = refs[1:1 + n_halo]
    w_ref, b_ref, g_ref, beta_ref, o_ref, acc_ref = refs[1 + n_halo:]

    # Conv as n_a * n_b MXU matmuls, each contracting K = s*s*C features.
    first = True
    for ai in range(n_a):                 # kernel-row tap group
        n_main = th - ai                  # output rows fed from the main block
        for bw in range(n_b):             # kernel-col tap group
            w_g = w_ref[ai * n_b + bw]    # (s*s*C, N)

            # Main rows [ai, th) -> output rows [0, th - ai).
            lhs = x_main_ref[ai:th, bw:bw + w_out, :].reshape(n_main * w_out, ssc)
            part = jnp.dot(lhs, w_g, preferred_element_type=jnp.float32)
            if first:                     # ai == 0: covers all th*w_out rows
                acc_ref[...] = part
                first = False
            else:
                acc_ref[0:n_main * w_out] += part

            # Halo rows r in [0, ai) -> output row (th - ai + r).
            for r in range(ai):
                lhs_h = halo_refs[r][0, bw:bw + w_out, :]        # (w_out, s*s*C)
                row0 = (n_main + r) * w_out
                acc_ref[row0:row0 + w_out] += jnp.dot(
                    lhs_h, w_g, preferred_element_type=jnp.float32)

    # Bias + LayerNorm (single-pass statistics), all in f32.
    y = acc_ref[...] + b_ref[...]
    inv_n = 1.0 / float(n_hidden)
    mean = jnp.sum(y, axis=-1, keepdims=True) * inv_n
    var = jnp.sum(y * y, axis=-1, keepdims=True) * inv_n - mean * mean
    out = (y - mean) * lax.rsqrt(var + eps) * g_ref[...] + beta_ref[...]
    o_ref[...] = out.astype(o_ref.dtype)


# ------------------------------ wrapper --------------------------------------
def segformer_patch_embed_forward(pixel_values, proj_weight, proj_bias,
                                  ln_weight, ln_bias, *, patch_size, stride,
                                  eps=1e-5, block_rows=32, out_dtype=None,
                                  compute_dtype=None):
    """pixel_values: (B, C, H, W) NCHW.

    Returns ((B, H_out*W_out, hidden), H_out, W_out), matching the PyTorch module.
    """
    B, C, H, W = pixel_values.shape
    k, s = patch_size, stride
    p = k // 2
    N = proj_weight.shape[0]

    H_out = (H + 2 * p - k) // s + 1
    W_out = (W + 2 * p - k) // s + 1

    n_a = _cdiv(k, s)          # tap groups along H (and W); taps >= k get zero weight
    n_b = n_a
    kp = n_a * s               # padded kernel extent
    n_halo = n_a - 1
    ssc = s * s * C            # folded contraction size per tap group

    # Output-row tile.  When the tile does not cover all of H_out, keep it a
    # multiple of 8 so the (th*W_out, N) output block stays sublane-aligned.
    th = min(block_rows, H_out)
    if th < H_out:
        th = max(8, (th // 8) * 8)
        if th >= H_out:
            th = H_out
    n_t = _cdiv(H_out, th)

    # Padded / phase-folded input geometry.  Every in-kernel read is in-bounds by
    # construction; extra rows/cols only meet zero-padded weight taps or ragged
    # output rows that Pallas masks on writeback.
    Ha = n_t * th + n_halo
    Wr = W_out + (n_b - 1)
    Hp = Ha * s
    Wp = Wr * s

    if compute_dtype is not None:          # optional bf16 path (acc/LN stay f32)
        pixel_values = pixel_values.astype(compute_dtype)
        proj_weight = proj_weight.astype(compute_dtype)

    # NHWC + zero pad (single pass), then fold BOTH stride phases into the
    # trailing dim: (B, Hp, Wp, C) -> (B, Ha, Wr, s*s*C).
    x_nhwc = jnp.transpose(pixel_values, (0, 2, 3, 1))
    xp = jnp.pad(x_nhwc, ((0, 0), (p, Hp - H - p), (p, Wp - W - p), (0, 0)))
    xps = xp.reshape(B, Ha, s, Wr, s, C)
    xps = jnp.transpose(xps, (0, 1, 3, 2, 4, 5)).reshape(B, Ha, Wr, ssc)

    # Pack conv weight (N, C, k, k) -> (n_a*n_b, s*s*C, N); taps >= k are zero.
    w4 = jnp.zeros((kp, kp, C, N), proj_weight.dtype)
    w4 = w4.at[:k, :k].set(jnp.transpose(proj_weight, (2, 3, 1, 0)))
    w_packed = (w4.reshape(n_a, s, n_b, s, C, N)
                  .transpose(0, 2, 1, 3, 4, 5)
                  .reshape(n_a * n_b, ssc, N))

    bias2 = proj_bias.reshape(1, N).astype(jnp.float32)
    gamma2 = ln_weight.reshape(1, N).astype(jnp.float32)
    beta2 = ln_bias.reshape(1, N).astype(jnp.float32)

    out_dtype = pixel_values.dtype if out_dtype is None else out_dtype

    in_specs = [
        # Main block: th phase-folded rows (a fully contiguous HBM range).
        pl.BlockSpec((None, th, Wr, ssc), lambda b, t: (b, t, 0, 0)),
    ]
    # Halo rows: the (n_a - 1) overlapping rows owned by the next tile.
    for r in range(n_halo):
        in_specs.append(
            pl.BlockSpec((None, 1, Wr, ssc),
                         lambda b, t, r=r: (b, (t + 1) * th + r, 0, 0)))
    in_specs += [
        pl.BlockSpec((n_a * n_b, ssc, N), lambda b, t: (0, 0, 0)),  # packed weight
        pl.BlockSpec((1, N), lambda b, t: (0, 0)),                  # conv bias
        pl.BlockSpec((1, N), lambda b, t: (0, 0)),                  # LN weight
        pl.BlockSpec((1, N), lambda b, t: (0, 0)),                  # LN bias
    ]

    kernel = functools.partial(
        _conv_ln_kernel, th=th, w_out=W_out, n_a=n_a, n_b=n_b,
        n_hidden=N, ssc=ssc, eps=eps)

    itemsize_in = jnp.dtype(xps.dtype).itemsize
    itemsize_w = jnp.dtype(w_packed.dtype).itemsize
    itemsize_out = jnp.dtype(out_dtype).itemsize
    cost = pl.CostEstimate(
        flops=2 * B * H_out * W_out * k * k * C * N + 8 * B * H_out * W_out * N,
        transcendentals=B * H_out * W_out,
        bytes_accessed=(xps.size * itemsize_in + w_packed.size * itemsize_w
                        + B * H_out * W_out * N * itemsize_out),
    )

    out = pl.pallas_call(
        kernel,
        out_shape=jax.ShapeDtypeStruct((B, H_out * W_out, N), out_dtype),
        grid=(B, n_t),
        in_specs=in_specs,
        out_specs=pl.BlockSpec((None, th * W_out, N), lambda b, t: (b, t, 0)),
        scratch_shapes=[pltpu.VMEM((th * W_out, N), jnp.float32)],
        compiler_params=pltpu.CompilerParams(
            dimension_semantics=("parallel", "parallel")),
        cost_estimate=cost,
    )(xps, *([xps] * n_halo), w_packed, bias2, gamma2, beta2)

    return out, H_out, W_out


# ------------------------------ module ---------------------------------------
class SegformerOverlapPatchEmbeddingsPallas:
    """Pallas port of SegformerOverlapPatchEmbeddings.forward."""

    def __init__(self, patch_size, stride, num_channels, hidden_size, key):
        self.patch_size = patch_size
        self.stride = stride
        self.num_channels = num_channels
        self.hidden_size = hidden_size
        self.padding = patch_size // 2

        k0, k1, k2, k3 = jax.random.split(key, 4)
        fan_in = num_channels * patch_size * patch_size
        bound = 1.0 / (fan_in ** 0.5)
        self.proj_weight = jax.random.uniform(
            k0, (hidden_size, num_channels, patch_size, patch_size),
            minval=-bound, maxval=bound, dtype=jnp.float32)
        self.proj_bias = jax.random.uniform(
            k1, (hidden_size,), minval=-bound, maxval=bound, dtype=jnp.float32)
        self.ln_weight = 1.0 + 0.02 * jax.random.normal(k2, (hidden_size,), dtype=jnp.float32)
        self.ln_bias = 0.02 * jax.random.normal(k3, (hidden_size,), dtype=jnp.float32)
        self.ln_eps = 1e-5

    def __call__(self, pixel_values, *, block_rows=32, out_dtype=None,
                 compute_dtype=None):
        return segformer_patch_embed_forward(
            pixel_values, self.proj_weight, self.proj_bias,
            self.ln_weight, self.ln_bias,
            patch_size=self.patch_size, stride=self.stride,
            eps=self.ln_eps, block_rows=block_rows,
            out_dtype=out_dtype, compute_dtype=compute_dtype)


# ----------------------------- reference (plain JAX) --------------------------
def _reference_forward(mod, pixel_values):
    y = lax.conv_general_dilated(
        pixel_values, mod.proj_weight,
        window_strides=(mod.stride, mod.stride),
        padding=[(mod.padding, mod.padding), (mod.padding, mod.padding)],
        dimension_numbers=("NCHW", "OIHW", "NCHW"),
        precision=lax.Precision.HIGHEST,
    ) + mod.proj_bias.reshape(1, -1, 1, 1)
    B, Cout, H, W = y.shape
    y = y.reshape(B, Cout, H * W).transpose(0, 2, 1)       # (B, HW, hidden)
    mean = jnp.mean(y, axis=-1, keepdims=True)
    var = jnp.mean((y - mean) ** 2, axis=-1, keepdims=True)
    y = (y - mean) * lax.rsqrt(var + mod.ln_eps)
    y = y * mod.ln_weight + mod.ln_bias
    return y, H, W


if __name__ == "__main__":
    key = jax.random.PRNGKey(0)
    k_param, k_input = jax.random.split(key)

    # Small Segformer-stage-like config: patch_size=3, stride=2, C=4, hidden=32.
    patch_size, stride, num_channels, hidden_size = 3, 2, 4, 32
    module = SegformerOverlapPatchEmbeddingsPallas(
        patch_size, stride, num_channels, hidden_size, k_param)

    # Input: (B=2, C=4, H=32, W=32) NCHW -> H_out = W_out = 16.
    pixel_values = jax.random.normal(k_input, (2, 4, 32, 32), dtype=jnp.float32)

    # block_rows=8 -> H_out=16 split into 2 row tiles per batch, exercising the
    # halo BlockSpecs and the multi-step grid (production default is 32).
    emb, h, w = module(pixel_values, block_rows=8)
    emb = jax.block_until_ready(emb)

    ref_emb, ref_h, ref_w = _reference_forward(module, pixel_values)
    assert (h, w) == (ref_h, ref_w), f"spatial mismatch: {(h, w)} vs {(ref_h, ref_w)}"
    assert emb.shape == ref_emb.shape, f"shape mismatch: {emb.shape} vs {ref_emb.shape}"
    max_err = jnp.max(jnp.abs(emb - ref_emb))
    assert jnp.allclose(emb, ref_emb, atol=1e-3, rtol=1e-3), \
        f"numerical mismatch vs reference (max abs err {max_err})"

    print("KERNEL_OK")
</pallas_src>

<mosaic_0001>
module attributes {stable_mosaic.version = 11 : i64} {
  func.func @_conv_ln_kernel(%arg0: i32, %arg1: i32, %arg2: memref<1x8x17x16xf32, #tpu.memory_space<vmem>>, %arg3: memref<1x1x17x16xf32, #tpu.memory_space<vmem>>, %arg4: memref<4x16x32xf32, #tpu.memory_space<vmem>>, %arg5: memref<1x32xf32, #tpu.memory_space<vmem>>, %arg6: memref<1x32xf32, #tpu.memory_space<vmem>>, %arg7: memref<1x32xf32, #tpu.memory_space<vmem>>, %arg8: memref<1x128x32xf32, #tpu.memory_space<vmem>>, %arg9: memref<128x32xf32, #tpu.memory_space<vmem>>) attributes {dimension_semantics = [#tpu.dimension_semantics<parallel>, #tpu.dimension_semantics<parallel>], iteration_bounds = array<i64: 2, 2>, scalar_prefetch = 0 : i64, scratch_operands = 1 : i64, tpu.core_type = #tpu.core_type<tc>, window_params = [{transform_indices = @transform_0, window_bounds = array<i64: 1, 8, 17, 16>}, {transform_indices = @transform_1, window_bounds = array<i64: 1, 1, 17, 16>}, {pipeline_mode = #tpu.pipeline_mode<synchronous>, transform_indices = @transform_2, window_bounds = array<i64: 4, 16, 32>}, {pipeline_mode = #tpu.pipeline_mode<synchronous>, transform_indices = @transform_3, window_bounds = array<i64: 1, 32>}, {pipeline_mode = #tpu.pipeline_mode<synchronous>, transform_indices = @transform_4, window_bounds = array<i64: 1, 32>}, {pipeline_mode = #tpu.pipeline_mode<synchronous>, transform_indices = @transform_5, window_bounds = array<i64: 1, 32>}, {transform_indices = @transform_6, window_bounds = array<i64: 1, 128, 32>}]} {
    %c0 = arith.constant 0 : index
    %c0_0 = arith.constant 0 : index
    %c0_1 = arith.constant 0 : index
    %0 = vector.load %arg4[%c0, %c0_0, %c0_1] : memref<4x16x32xf32, #tpu.memory_space<vmem>>, vector<1x16x32xf32>
    %1 = vector.shape_cast %0 : vector<1x16x32xf32> to vector<16x32xf32>
    %c0_2 = arith.constant 0 : index
    %c0_3 = arith.constant 0 : index
    %c0_4 = arith.constant 0 : index
    %c0_5 = arith.constant 0 : index
    %2 = vector.load %arg2[%c0_2, %c0_3, %c0_4, %c0_5] : memref<1x8x17x16xf32, #tpu.memory_space<vmem>>, vector<1x8x16x16xf32>
    %3 = vector.shape_cast %2 : vector<1x8x16x16xf32> to vector<8x16x16xf32>
    %4 = vector.shape_cast %3 : vector<8x16x16xf32> to vector<128x16xf32>
    %cst = arith.constant dense<0.000000e+00> : vector<128x32xf32>
    %5 = tpu.matmul %4, %1, %cst {dimension_numbers = #tpu.dot_dimension_numbers<[1], [0], [0], [1], [0, 0, 1, 1], [], []>} : vector<128x16xf32>, vector<16x32xf32>, vector<128x32xf32> -> vector<128x32xf32>
    %c0_6 = arith.constant 0 : index
    %c0_7 = arith.constant 0 : index
    %6 = vector.load %arg9[%c0_6, %c0_7] : memref<128x32xf32, #tpu.memory_space<vmem>>, vector<128x32xf32>
    tpu.vector_store %arg9[%c0_6, %c0_7], %5 {strides = array<i32>} : memref<128x32xf32, #tpu.memory_space<vmem>>, vector<128x32xf32>,
    %c1 = arith.constant 1 : index
    %c0_8 = arith.constant 0 : index
    %c0_9 = arith.constant 0 : index
    %7 = vector.load %arg4[%c1, %c0_8, %c0_9] : memref<4x16x32xf32, #tpu.memory_space<vmem>>, vector<1x16x32xf32>
    %8 = vector.shape_cast %7 : vector<1x16x32xf32> to vector<16x32xf32>
    %c0_10 = arith.constant 0 : index
    %c0_11 = arith.constant 0 : index
    %c1_12 = arith.constant 1 : index
    %c0_13 = arith.constant 0 : index
    %9 = vector.load %arg2[%c0_10, %c0_11, %c1_12, %c0_13] : memref<1x8x17x16xf32, #tpu.memory_space<vmem>>, vector<1x8x16x16xf32>
    %10 = vector.shape_cast %9 : vector<1x8x16x16xf32> to vector<8x16x16xf32>
    %11 = vector.shape_cast %10 : vector<8x16x16xf32> to vector<128x16xf32>
    %cst_14 = arith.constant dense<0.000000e+00> : vector<128x32xf32>
    %12 = tpu.matmul %11, %8, %cst_14 {dimension_numbers = #tpu.dot_dimension_numbers<[1], [0], [0], [1], [0, 0, 1, 1], [], []>} : vector<128x16xf32>, vector<16x32xf32>, vector<128x32xf32> -> vector<128x32xf32>
    %c0_15 = arith.constant 0 : index
    %c0_16 = arith.constant 0 : index
    %13 = vector.load %arg9[%c0_15, %c0_16] : memref<128x32xf32, #tpu.memory_space<vmem>>, vector<128x32xf32>
    %14 = arith.addf %13, %12 : vector<128x32xf32>
    %c0_17 = arith.constant 0 : index
    %c0_18 = arith.constant 0 : index
    %15 = vector.load %arg9[%c0_17, %c0_18] : memref<128x32xf32, #tpu.memory_space<vmem>>, vector<128x32xf32>
    tpu.vector_store %arg9[%c0_17, %c0_18], %14 {strides = array<i32>} : memref<128x32xf32, #tpu.memory_space<vmem>>, vector<128x32xf32>,
    %c2 = arith.constant 2 : index
    %c0_19 = arith.constant 0 : index
    %c0_20 = arith.constant 0 : index
    %16 = vector.load %arg4[%c2, %c0_19, %c0_20] : memref<4x16x32xf32, #tpu.memory_space<vmem>>, vector<1x16x32xf32>
    %17 = vector.shape_cast %16 : vector<1x16x32xf32> to vector<16x32xf32>
    %c0_21 = arith.constant 0 : index
    %c1_22 = arith.constant 1 : index
    %c0_23 = arith.constant 0 : index
    %c0_24 = arith.constant 0 : index
    %18 = vector.load %arg2[%c0_21, %c1_22, %c0_23, %c0_24] : memref<1x8x17x16xf32, #tpu.memory_space<vmem>>, vector<1x7x16x16xf32>
    %19 = vector.shape_cast %18 : vector<1x7x16x16xf32> to vector<7x16x16xf32>
    %20 = vector.shape_cast %19 : vector<7x16x16xf32> to vector<112x16xf32>
    %cst_25 = arith.constant dense<0.000000e+00> : vector<112x32xf32>
    %21 = tpu.matmul %20, %17, %cst_25 {dimension_numbers = #tpu.dot_dimension_numbers<[1], [0], [0], [1], [0, 0, 1, 1], [], []>} : vector<112x16xf32>, vector<16x32xf32>, vector<112x32xf32> -> vector<112x32xf32>
    %c0_26 = arith.constant 0 : index
    %c0_27 = arith.constant 0 : index
    %22 = vector.load %arg9[%c0_26, %c0_27] : memref<128x32xf32, #tpu.memory_space<vmem>>, vector<112x32xf32>
    %23 = arith.addf %22, %21 : vector<112x32xf32>
    %c0_28 = arith.constant 0 : index
    %c0_29 = arith.constant 0 : index
    %24 = vector.load %arg9[%c0_28, %c0_29] : memref<128x32xf32, #tpu.memory_space<vmem>>, vector<112x32xf32>
    tpu.vector_store %arg9[%c0_28, %c0_29], %23 {strides = array<i32>} : memref<128x32xf32, #tpu.memory_space<vmem>>, vector<112x32xf32>,
    %c0_30 = arith.constant 0 : index
    %c0_31 = arith.constant 0 : index
    %c0_32 = arith.constant 0 : index
    %c0_33 = arith.constant 0 : index
    %25 = vector.load %arg3[%c0_30, %c0_31, %c0_32, %c0_33] : memref<1x1x17x16xf32, #tpu.memory_space<vmem>>, vector<1x1x16x16xf32>
    %26 = vector.shape_cast %25 : vector<1x1x16x16xf32> to vector<16x16xf32>
    %c112 = arith.constant 112 : index
    %c0_34 = arith.constant 0 : index
    %27 = vector.load %arg9[%c112, %c0_34] : memref<128x32xf32, #tpu.memory_space<vmem>>, vector<16x32xf32>
    %cst_35 = arith.constant dense<0.000000e+00> : vector<16x32xf32>
    %28 = tpu.matmul %26, %17, %cst_35 {dimension_numbers = #tpu.dot_dimension_numbers<[1], [0], [0], [1], [0, 0, 1, 1], [], []>} : vector<16x16xf32>, vector<16x32xf32>, vector<16x32xf32> -> vector<16x32xf32>
    %29 = arith.addf %27, %28 : vector<16x32xf32>
    %c112_36 = arith.constant 112 : index
    %c0_37 = arith.constant 0 : index
    %30 = vector.load %arg9[%c112_36, %c0_37] : memref<128x32xf32, #tpu.memory_space<vmem>>, vector<16x32xf32>
    tpu.vector_store %arg9[%c112_36, %c0_37], %29 {strides = array<i32>} : memref<128x32xf32, #tpu.memory_space<vmem>>, vector<16x32xf32>,
    %c3 = arith.constant 3 : index
    %c0_38 = arith.constant 0 : index
    %c0_39 = arith.constant 0 : index
    %31 = vector.load %arg4[%c3, %c0_38, %c0_39] : memref<4x16x32xf32, #tpu.memory_space<vmem>>, vector<1x16x32xf32>
    %32 = vector.shape_cast %31 : vector<1x16x32xf32> to vector<16x32xf32>
    %c0_40 = arith.constant 0 : index
    %c1_41 = arith.constant 1 : index
    %c1_42 = arith.constant 1 : index
    %c0_43 = arith.constant 0 : index
    %33 = vector.load %arg2[%c0_40, %c1_41, %c1_42, %c0_43] : memref<1x8x17x16xf32, #tpu.memory_space<vmem>>, vector<1x7x16x16xf32>
    %34 = vector.shape_cast %33 : vector<1x7x16x16xf32> to vector<7x16x16xf32>
    %35 = vector.shape_cast %34 : vector<7x16x16xf32> to vector<112x16xf32>
    %cst_44 = arith.constant dense<0.000000e+00> : vector<112x32xf32>
    %36 = tpu.matmul %35, %32, %cst_44 {dimension_numbers = #tpu.dot_dimension_numbers<[1], [0], [0], [1], [0, 0, 1, 1], [], []>} : vector<112x16xf32>, vector<16x32xf32>, vector<112x32xf32> -> vector<112x32xf32>
    %c0_45 = arith.constant 0 : index
    %c0_46 = arith.constant 0 : index
    %37 = vector.load %arg9[%c0_45, %c0_46] : memref<128x32xf32, #tpu.memory_space<vmem>>, vector<112x32xf32>
    %38 = arith.addf %37, %36 : vector<112x32xf32>
    %c0_47 = arith.constant 0 : index
    %c0_48 = arith.constant 0 : index
    %39 = vector.load %arg9[%c0_47, %c0_48] : memref<128x32xf32, #tpu.memory_space<vmem>>, vector<112x32xf32>
    tpu.vector_store %arg9[%c0_47, %c0_48], %38 {strides = array<i32>} : memref<128x32xf32, #tpu.memory_space<vmem>>, vector<112x32xf32>,
    %c0_49 = arith.constant 0 : index
    %c0_50 = arith.constant 0 : index
    %c1_51 = arith.constant 1 : index
    %c0_52 = arith.constant 0 : index
    %40 = vector.load %arg3[%c0_49, %c0_50, %c1_51, %c0_52] : memref<1x1x17x16xf32, #tpu.memory_space<vmem>>, vector<1x1x16x16xf32>
    %41 = vector.shape_cast %40 : vector<1x1x16x16xf32> to vector<16x16xf32>
    %c112_53 = arith.constant 112 : index
    %c0_54 = arith.constant 0 : index
    %42 = vector.load %arg9[%c112_53, %c0_54] : memref<128x32xf32, #tpu.memory_space<vmem>>, vector<16x32xf32>
    %cst_55 = arith.constant dense<0.000000e+00> : vector<16x32xf32>
    %43 = tpu.matmul %41, %32, %cst_55 {dimension_numbers = #tpu.dot_dimension_numbers<[1], [0], [0], [1], [0, 0, 1, 1], [], []>} : vector<16x16xf32>, vector<16x32xf32>, vector<16x32xf32> -> vector<16x32xf32>
    %44 = arith.addf %42, %43 : vector<16x32xf32>
    %c112_56 = arith.constant 112 : index
    %c0_57 = arith.constant 0 : index
    %45 = vector.load %arg9[%c112_56, %c0_57] : memref<128x32xf32, #tpu.memory_space<vmem>>, vector<16x32xf32>
    tpu.vector_store %arg9[%c112_56, %c0_57], %44 {strides = array<i32>} : memref<128x32xf32, #tpu.memory_space<vmem>>, vector<16x32xf32>,
    %c0_58 = arith.constant 0 : index
    %c0_59 = arith.constant 0 : index
    %46 = vector.load %arg9[%c0_58, %c0_59] : memref<128x32xf32, #tpu.memory_space<vmem>>, vector<128x32xf32>
    %c0_60 = arith.constant 0 : index
    %c0_61 = arith.constant 0 : index
    %47 = vector.load %arg5[%c0_60, %c0_61] : memref<1x32xf32, #tpu.memory_space<vmem>>, vector<1x32xf32>
    %48 = vector.broadcast %47 : vector<1x32xf32> to vector<128x32xf32>
    %49 = arith.addf %46, %48 : vector<128x32xf32>
    %cst_62 = arith.constant dense<0.000000e+00> : vector<128xf32>
    %50 = vector.multi_reduction <add>, %49, %cst_62 [1] : vector<128x32xf32> to vector<128xf32>
    %51 = vector.shape_cast %50 : vector<128xf32> to vector<128x1xf32>
    %cst_63 = arith.constant 3.125000e-02 : f32
    %52 = vector.broadcast %cst_63 : f32 to vector<128x1xf32>
    %53 = arith.mulf %51, %52 : vector<128x1xf32>
    %54 = arith.mulf %49, %49 : vector<128x32xf32>
    %cst_64 = arith.constant dense<0.000000e+00> : vector<128xf32>
    %55 = vector.multi_reduction <add>, %54, %cst_64 [1] : vector<128x32xf32> to vector<128xf32>
    %56 = vector.shape_cast %55 : vector<128xf32> to vector<128x1xf32>
    %cst_65 = arith.constant 3.125000e-02 : f32
    %57 = vector.broadcast %cst_65 : f32 to vector<128x1xf32>
    %58 = arith.mulf %56, %57 : vector<128x1xf32>
    %59 = arith.mulf %53, %53 : vector<128x1xf32>
    %60 = arith.subf %58, %59 : vector<128x1xf32>
    %61 = vector.broadcast %53 : vector<128x1xf32> to vector<128x32xf32>
    %62 = arith.subf %49, %61 : vector<128x32xf32>
    %cst_66 = arith.constant 9.99999974E-6 : f32
    %63 = vector.broadcast %cst_66 : f32 to vector<128x1xf32>
    %64 = arith.addf %60, %63 : vector<128x1xf32>
    %65 = math.rsqrt %64 : vector<128x1xf32>
    %66 = vector.broadcast %65 : vector<128x1xf32> to vector<128x32xf32>
    %67 = arith.mulf %62, %66 : vector<128x32xf32>
    %c0_67 = arith.constant 0 : index
    %c0_68 = arith.constant 0 : index
    %68 = vector.load %arg6[%c0_67, %c0_68] : memref<1x32xf32, #tpu.memory_space<vmem>>, vector<1x32xf32>
    %69 = vector.broadcast %68 : vector<1x32xf32> to vector<128x32xf32>
    %70 = arith.mulf %67, %69 : vector<128x32xf32>
    %c0_69 = arith.constant 0 : index
    %c0_70 = arith.constant 0 : index
    %71 = vector.load %arg7[%c0_69, %c0_70] : memref<1x32xf32, #tpu.memory_space<vmem>>, vector<1x32xf32>
    %72 = vector.broadcast %71 : vector<1x32xf32> to vector<128x32xf32>
    %73 = arith.addf %70, %72 : vector<128x32xf32>
    %c0_71 = arith.constant 0 : index
    %c0_72 = arith.constant 0 : index
    %c0_73 = arith.constant 0 : index
    %74 = vector.load %arg8[%c0_71, %c0_72, %c0_73] : memref<1x128x32xf32, #tpu.memory_space<vmem>>, vector<1x128x32xf32>
    %75 = vector.shape_cast %74 : vector<1x128x32xf32> to vector<128x32xf32>
    %76 = vector.shape_cast %73 : vector<128x32xf32> to vector<1x128x32xf32>
    tpu.vector_store %arg8[%c0_71, %c0_72, %c0_73], %76 {strides = array<i32>} : memref<1x128x32xf32, #tpu.memory_space<vmem>>, vector<1x128x32xf32>,
    return
  }
  func.func @transform_0(%arg0: i32, %arg1: i32) -> (i32, i32, i32, i32) {
    %c0_i32 = arith.constant 0 : i32
    %c0_i32_0 = arith.constant 0 : i32
    %c0_i32_1 = arith.constant 0 : i32
    return %arg0, %arg1, %c0_i32, %c0_i32_0 : i32, i32, i32, i32
  }
  func.func @transform_1(%arg0: i32, %arg1: i32) -> (i32, i32, i32, i32) {
    %c1_i32 = arith.constant 1 : i32
    %0 = arith.addi %arg1, %c1_i32 : i32
    %c8_i32 = arith.constant 8 : i32
    %1 = arith.muli %0, %c8_i32 : i32
    %c0_i32 = arith.constant 0 : i32
    %2 = arith.addi %1, %c0_i32 : i32
    %c0_i32_0 = arith.constant 0 : i32
    %c0_i32_1 = arith.constant 0 : i32
    %c0_i32_2 = arith.constant 0 : i32
    return %arg0, %2, %c0_i32_0, %c0_i32_1 : i32, i32, i32, i32
  }
  func.func @transform_2(%arg0: i32, %arg1: i32) -> (i32, i32, i32) {
    %c0_i32 = arith.constant 0 : i32
    %c0_i32_0 = arith.constant 0 : i32
    %c0_i32_1 = arith.constant 0 : i32
    %c0_i32_2 = arith.constant 0 : i32
    return %c0_i32, %c0_i32_0, %c0_i32_1 : i32, i32, i32
  }
  func.func @transform_3(%arg0: i32, %arg1: i32) -> (i32, i32) {
    %c0_i32 = arith.constant 0 : i32
    %c0_i32_0 = arith.constant 0 : i32
    %c0_i32_1 = arith.constant 0 : i32
    return %c0_i32, %c0_i32_0 : i32, i32
  }
  func.func @transform_4(%arg0: i32, %arg1: i32) -> (i32, i32) {
    %c0_i32 = arith.constant 0 : i32
    %c0_i32_0 = arith.constant 0 : i32
    %c0_i32_1 = arith.constant 0 : i32
    return %c0_i32, %c0_i32_0 : i32, i32
  }
  func.func @transform_5(%arg0: i32, %arg1: i32) -> (i32, i32) {
    %c0_i32 = arith.constant 0 : i32
    %c0_i32_0 = arith.constant 0 : i32
    %c0_i32_1 = arith.constant 0 : i32
    return %c0_i32, %c0_i32_0 : i32, i32
  }
  func.func @transform_6(%arg0: i32, %arg1: i32) -> (i32, i32, i32) {
    %c0_i32 = arith.constant 0 : i32
    %c0_i32_0 = arith.constant 0 : i32
    return %arg0, %arg1, %c0_i32 : i32, i32, i32
  }
}

</mosaic_0001>

<llo_original>
// kernel: tpu_custom_call.1
$region0: #{tpu_custom_call.1}
  #allocation0 [shape = 'u32[]', space=smem, size = 0x4, offset = 0x4, fixed_abs, tag = 'smem constant byte address 0x4 - core index']
  #allocation1 [shape = 'u32[144,128]{1,0:T(1,128)}', space=vmem, size = 0x12000, scoped, tag = 'internal scratch']
  #allocation2 [shape = 'f32[128,32]{1,0:T(8,128)}', space=vmem, size = 0x10000, scoped, tag = 'scratch operand']
  %s0 = inlined_call_operand.vmem [shape: f32[2,17,17,16], index: 0, kind: input, shape index: {}]
  %s1 = inlined_call_operand.vmem [shape: f32[2,17,17,16], index: 1, kind: input, shape index: {}]
  %s2 = inlined_call_operand.vmem [shape: f32[4,16,32], index: 2, kind: input, shape index: {}]
  %s3 = inlined_call_operand.vmem [shape: f32[1,32], index: 3, kind: input, shape index: {}]
  %s4 = inlined_call_operand.vmem [shape: f32[1,32], index: 4, kind: input, shape index: {}]
  %s5 = inlined_call_operand.vmem [shape: f32[1,32], index: 5, kind: input, shape index: {}]
  %s6 = inlined_call_operand.vmem [shape: f32[2,256,32], index: 6, kind: output, shape index: {}]
  %s7 = sld [smem:[#allocation0]]
  $region57: #{tpu_custom_call.1} parent=0
    _
  %s9 = ssub.s32 1, %s7
  %s10 = scalar_select 0, %s9, %s7
  loop: start=0, step=1, limit=6
  $region2: #{tpu_custom_call.1} parent=0 // loop_pre_header
    _
  $region3: #{tpu_custom_call.1} parent=0 // loop_header
    %s12 = sphi 0, %s16
    %p13 = scmp.ge.s32.totalorder %s12, 6
    %s19 = sphi 0, %s31
    %s20 = sphi 0, %s27
    %s21 = sphi 0, %s19
    %s22 = sphi 0, %s20
    %s23 = sphi 0, %s21
    %s24 = sphi 0, %s22
    %s36 = sphi 0, %s38
    %s39 = sphi 0, %s36
    %s40 = sphi 0, %s39
    %s56 = sphi 0, %s40
    %s68 = sphi 0, %s70
    %s71 = sphi 0, %s68
    %s72 = sphi 0, %s71
    %s88 = sphi 0, %s72
    %s92 = sphi 0, %s92
    %s94 = sphi 0, %s92
    %s95 = sphi 0, %s94
    %s109 = sphi 0, %s95
    %s113 = sphi 0, %s113
    %s115 = sphi 0, %s113
    %s116 = sphi 0, %s115
    %s130 = sphi 0, %s116
    %s134 = sphi 0, %s134
    %s136 = sphi 0, %s134
    %s137 = sphi 0, %s136
    %s151 = sphi 0, %s137
    %s155 = sphi 0, %s155
    %s157 = sphi 0, %s155
    %s158 = sphi 0, %s157
    %s172 = sphi 0, %s158
    %s180 = sphi 0, %s182
    %s183 = sphi 0, %s180
    %s184 = sphi 0, %s183
    %s200 = sphi 0, %s184
  $region4: #{tpu_custom_call.1} parent=0 // loop_header_branch
    %15 = sbr.rel (%p13) target = $region8
  $region5: #{tpu_custom_call.1} parent=0 // loop_body
    %s17 = ssub.s32 %s12, 1
    %s18 = ssub.s32 %s12, 2
    %s25 = sadd.s32 1, %s20
    %p26 = scmp.ge.s32.totalorder %s25, 2
    %s27 = scalar_select %p26, 0, %s25
    %s28 = sadd.s32 1, %s19
    %s29 = scalar_select %p26, %s28, %s19
    %p30 = scmp.ge.s32.totalorder %s29, 2
    %s31 = scalar_select %p30, 0, %s29
    %s32 = ssub.s32 %s19, %s31
    %s33 = ssub.s32 %s20, %s27
    %s34 = sor.u32 %s32, %s33
    %p35 = scmp.eq.s32.totalorder %s34, 0
    %s37 = sadd.s32 %s36, 1
    %s38 = scalar_select %p35, %s36, %s37
    %p41 = pneg %p35
    %p42 = scmp.eq.s32.totalorder %s12, 3
    %p43 = por %p41, %p42
    %p44 = scmp.ne.s32.totalorder %s36, %s39
    %p45 = scmp.eq.s32.totalorder %s12, 0
    %p46 = por %p44, %p45
    %p47 = scmp.ne.s32.totalorder %s36, %s39
    %p48 = scmp.eq.s32.totalorder %s17, 3
    %p49 = por %p47, %p48
    %p50 = scmp.ne.s32.totalorder %s39, %s40
    %p51 = scmp.eq.s32.totalorder %s17, 0
    %p52 = por %p50, %p51
    %p53 = scmp.ne.s32.totalorder %s39, %s40
    %p54 = scmp.eq.s32.totalorder %s18, 3
    %p55 = por %p53, %p54
    %p57 = scmp.ne.s32.totalorder %s40, %s56
    %p58 = scmp.eq.s32.totalorder %s18, 0
    %p59 = por %p57, %p58
    %s60 = sadd.s32 %s20, 1
    %s61 = smul.u32 %s60, 8
    %s62 = sadd.s32 %s27, 1
    %s63 = smul.u32 %s62, 8
    %s64 = ssub.s32 %s19, %s31
    %s65 = ssub.s32 %s61, %s63
    %s66 = sor.u32 %s64, %s65
    %p67 = scmp.eq.s32.totalorder %s66, 0
    %s69 = sadd.s32 %s68, 1
    %s70 = scalar_select %p67, %s68, %s69
    %p73 = pneg %p67
    %p74 = scmp.eq.s32.totalorder %s12, 3
    %p75 = por %p73, %p74
    %p76 = scmp.ne.s32.totalorder %s68, %s71
    %p77 = scmp.eq.s32.totalorder %s12, 0
    %p78 = por %p76, %p77
    %p79 = scmp.ne.s32.totalorder %s68, %s71
    %p80 = scmp.eq.s32.totalorder %s17, 3
    %p81 = por %p79, %p80
    %p82 = scmp.ne.s32.totalorder %s71, %s72
    %p83 = scmp.eq.s32.totalorder %s17, 0
    %p84 = por %p82, %p83
    %p85 = scmp.ne.s32.totalorder %s71, %s72
    %p86 = scmp.eq.s32.totalorder %s18, 3
    %p87 = por %p85, %p86
    %p89 = scmp.ne.s32.totalorder %s72, %s88
    %p90 = scmp.eq.s32.totalorder %s18, 0
    %p91 = por %p89, %p90
    %s93 = sadd.s32 %s92, 1
    %p96 = scmp.eq.s32.totalorder %s12, 3
    %p97 = scmp.ne.s32.totalorder %s92, %s94
    %p98 = scmp.eq.s32.totalorder %s12, 0
    %p99 = por %p97, %p98
    %p100 = scmp.ne.s32.totalorder %s92, %s94
    %p101 = scmp.eq.s32.totalorder %s17, 3
    %p102 = por %p100, %p101
    %p103 = scmp.ne.s32.totalorder %s94, %s95
    %p104 = scmp.eq.s32.totalorder %s17, 0
    %p105 = por %p103, %p104
    %p106 = scmp.ne.s32.totalorder %s94, %s95
    %p107 = scmp.eq.s32.totalorder %s18, 3
    %p108 = por %p106, %p107
    %p110 = scmp.ne.s32.totalorder %s95, %s109
    %p111 = scmp.eq.s32.totalorder %s18, 0
    %p112 = por %p110, %p111
    %s114 = sadd.s32 %s113, 1
    %p117 = scmp.eq.s32.totalorder %s12, 3
    %p118 = scmp.ne.s32.totalorder %s113, %s115
    %p119 = scmp.eq.s32.totalorder %s12, 0
    %p120 = por %p118, %p119
    %p121 = scmp.ne.s32.totalorder %s113, %s115
    %p122 = scmp.eq.s32.totalorder %s17, 3
    %p123 = por %p121, %p122
    %p124 = scmp.ne.s32.totalorder %s115, %s116
    %p125 = scmp.eq.s32.totalorder %s17, 0
    %p126 = por %p124, %p125
    %p127 = scmp.ne.s32.totalorder %s115, %s116
    %p128 = scmp.eq.s32.totalorder %s18, 3
    %p129 = por %p127, %p128
    %p131 = scmp.ne.s32.totalorder %s116, %s130
    %p132 = scmp.eq.s32.totalorder %s18, 0
    %p133 = por %p131, %p132
    %s135 = sadd.s32 %s134, 1
    %p138 = scmp.eq.s32.totalorder %s12, 3
    %p139 = scmp.ne.s32.totalorder %s134, %s136
    %p140 = scmp.eq.s32.totalorder %s12, 0
    %p141 = por %p139, %p140
    %p142 = scmp.ne.s32.totalorder %s134, %s136
    %p143 = scmp.eq.s32.totalorder %s17, 3
    %p144 = por %p142, %p143
    %p145 = scmp.ne.s32.totalorder %s136, %s137
    %p146 = scmp.eq.s32.totalorder %s17, 0
    %p147 = por %p145, %p146
    %p148 = scmp.ne.s32.totalorder %s136, %s137
    %p149 = scmp.eq.s32.totalorder %s18, 3
    %p150 = por %p148, %p149
    %p152 = scmp.ne.s32.totalorder %s137, %s151
    %p153 = scmp.eq.s32.totalorder %s18, 0
    %p154 = por %p152, %p153
    %s156 = sadd.s32 %s155, 1
    %p159 = scmp.eq.s32.totalorder %s12, 3
    %p160 = scmp.ne.s32.totalorder %s155, %s157
    %p161 = scmp.eq.s32.totalorder %s12, 0
    %p162 = por %p160, %p161
    %p163 = scmp.ne.s32.totalorder %s155, %s157
    %p164 = scmp.eq.s32.totalorder %s17, 3
    %p165 = por %p163, %p164
    %p166 = scmp.ne.s32.totalorder %s157, %s158
    %p167 = scmp.eq.s32.totalorder %s17, 0
    %p168 = por %p166, %p167
    %p169 = scmp.ne.s32.totalorder %s157, %s158
    %p170 = scmp.eq.s32.totalorder %s18, 3
    %p171 = por %p169, %p170
    %p173 = scmp.ne.s32.totalorder %s158, %s172
    %p174 = scmp.eq.s32.totalorder %s18, 0
    %p175 = por %p173, %p174
    %s176 = ssub.s32 %s19, %s31
    %s177 = ssub.s32 %s20, %s27
    %s178 = sor.u32 %s176, %s177
    %p179 = scmp.eq.s32.totalorder %s178, 0
    %s181 = sadd.s32 %s180, 1
    %s182 = scalar_select %p179, %s180, %s181
    %p185 = pneg %p179
    %p186 = scmp.eq.s32.totalorder %s12, 3
    %p187 = por %p185, %p186
    %p188 = scmp.ne.s32.totalorder %s180, %s183
    %p189 = scmp.eq.s32.totalorder %s12, 0
    %p190 = por %p188, %p189
    %p191 = scmp.ne.s32.totalorder %s180, %s183
    %p192 = scmp.eq.s32.totalorder %s17, 3
    %p193 = por %p191, %p192
    %p194 = scmp.ne.s32.totalorder %s183, %s184
    %p195 = scmp.eq.s32.totalorder %s17, 0
    %p196 = por %p194, %p195
    %p197 = scmp.ne.s32.totalorder %s183, %s184
    %p198 = scmp.eq.s32.totalorder %s18, 3
    %p199 = por %p197, %p198
    %p201 = scmp.ne.s32.totalorder %s184, %s200
    %p202 = scmp.eq.s32.totalorder %s18, 0
    %p203 = por %p201, %p202
    %p204 = scmp.le.s32.totalorder 1, %s12
    %p205 = scmp.lt.s32.totalorder %s12, 5
    %p206 = pnand %p204, %p205
    %p207 = pneg %p206
    // Predicated region
    $region9: #{tpu_custom_call.1} parent=5 // pred_check
      _
    $region10: #{tpu_custom_call.1} parent=5 // pred_check_branch
      %209 = sbr.rel (%p206) target = $region12
    $region11: #{tpu_custom_call.1} parent=5 // pred_region
      %s210 = ssub.s32 %s12, 1
      // Predicated region
      $region13: #{tpu_custom_call.1} parent=11 // pred_check
        %p211 = pneg %p105
      $region14: #{tpu_custom_call.1} parent=11 // pred_check_branch
        %213 = sbr.rel (%p211) target = $region16
      $region15: #{tpu_custom_call.1} parent=11 // pred_region
        _
      $region16: #{tpu_custom_call.1} parent=11 // pred_fallthru
        _
      // Predicated region
      $region17: #{tpu_custom_call.1} parent=11 // pred_check
        %p214 = pneg %p126
      $region18: #{tpu_custom_call.1} parent=11 // pred_check_branch
        %216 = sbr.rel (%p214) target = $region20
      $region19: #{tpu_custom_call.1} parent=11 // pred_region
        _
      $region20: #{tpu_custom_call.1} parent=11 // pred_fallthru
        _
      // Predicated region
      $region21: #{tpu_custom_call.1} parent=11 // pred_check
        %p217 = pneg %p147
      $region22: #{tpu_custom_call.1} parent=11 // pred_check_branch
        %219 = sbr.rel (%p217) target = $region24
      $region23: #{tpu_custom_call.1} parent=11 // pred_region
        _
      $region24: #{tpu_custom_call.1} parent=11 // pred_fallthru
        _
      // Predicated region
      $region25: #{tpu_custom_call.1} parent=11 // pred_check
        %p220 = pneg %p168
      $region26: #{tpu_custom_call.1} parent=11 // pred_check_branch
        %222 = sbr.rel (%p220) target = $region28
      $region27: #{tpu_custom_call.1} parent=11 // pred_region
        _
      $region28: #{tpu_custom_call.1} parent=11 // pred_fallthru
        _
    $region12: #{tpu_custom_call.1} parent=5 // pred_fallthru
      _
    %p223 = scmp.lt.s32.totalorder %s12, 4
    // Predicated region
    $region29: #{tpu_custom_call.1} parent=5 // pred_check
      %p224 = pneg %p223
    $region30: #{tpu_custom_call.1} parent=5 // pred_check_branch
      %226 = sbr.rel (%p224) target = $region32
    $region31: #{tpu_custom_call.1} parent=5 // pred_region
      // Predicated region
      $region33: #{tpu_custom_call.1} parent=31 // pred_check
        %p227 = pneg %p46
      $region34: #{tpu_custom_call.1} parent=31 // pred_check_branch
        %229 = sbr.rel (%p227) target = $region36
      $region35: #{tpu_custom_call.1} parent=31 // pred_region
        %s230 = smul.u32 8, %s20
        %s231 = ssub.s32 17, %s230
        %p232 = scmp.lt.s32.totalorder %s231, 8
        %s233 = scalar_select %p232, %s231, 8
        %s234 = smul.u32 128, %s233
        %s235 = smul.u32 %s234, 3
        %p236 = scmp.lt.s32.totalorder %s19, 1
        %s237 = scalar_select %p236, %s19, 1
        %p238 = scmp.lt.s32.totalorder %s230, 16
        %s239 = scalar_select %p238, %s230, 16
        %s240 = smul.addr %s239, 3
        %s241 = smul.addr %s237, 51
        %s242 = sadd.s32 %s240, %s241
        %s243 = smul.addr %s242, 8
        %s244 = scalar_lea.vmem %s0, %s243
        %s245 = smul.u32 8, %s20
        %s246 = ssub.s32 17, %s245
        %p247 = scmp.lt.s32.totalorder %s246, 8
        %s248 = scalar_select %p247, %s246, 8
        %s249 = smul.u32 128, %s248
        %s250 = smul.u32 %s249, 3
      $region36: #{tpu_custom_call.1} parent=31 // pred_fallthru
        _
      // Predicated region
      $region37: #{tpu_custom_call.1} parent=31 // pred_check
        %p251 = pneg %p78
      $region38: #{tpu_custom_call.1} parent=31 // pred_check_branch
        %253 = sbr.rel (%p251) target = $region40
      $region39: #{tpu_custom_call.1} parent=31 // pred_region
        %s254 = sadd.s32 %s20, 1
        %s255 = smul.u32 %s254, 8
        %p256 = scmp.lt.s32.totalorder %s19, 1
        %s257 = scalar_select %p256, %s19, 1
        %p258 = scmp.lt.s32.totalorder %s255, 16
        %s259 = scalar_select %p258, %s255, 16
        %s260 = smul.addr %s259, 3
        %s261 = smul.addr %s257, 51
        %s262 = sadd.s32 %s260, %s261
        %s263 = smul.addr %s262, 8
        %s264 = scalar_lea.vmem %s1, %s263
        %s265 = sadd.s32 %s20, 1
        %s266 = smul.u32 %s265, 8
      $region40: #{tpu_custom_call.1} parent=31 // pred_fallthru
        _
    $region32: #{tpu_custom_call.1} parent=5 // pred_fallthru
      _
    %p267 = scmp.le.s32.totalorder 1, %s12
    %p268 = scmp.lt.s32.totalorder %s12, 5
    %p269 = pnand %p267, %p268
    %p270 = pneg %p269
    // Predicated region
    $region41: #{tpu_custom_call.1} parent=5 // pred_check
      _
    $region42: #{tpu_custom_call.1} parent=5 // pred_check_branch
      %272 = sbr.rel (%p269) target = $region44
    $region43: #{tpu_custom_call.1} parent=5 // pred_region
      %s273 = ssub.s32 %s12, 1
      %s274 = smul.u32 8, %s22
      %s275 = ssub.s32 17, %s274
      %p276 = scmp.lt.s32.totalorder %s275, 8
      %s277 = scalar_select %p276, %s275, 8
      %s278 = smul.u32 128, %s277
      %s279 = smul.u32 %s278, 3
      %p280 = scmp.lt.s32.totalorder %s21, 1
      %s281 = scalar_select %p280, %s21, 1
      %p282 = scmp.lt.s32.totalorder %s274, 16
      %s283 = scalar_select %p282, %s274, 16
      %s284 = smul.addr %s283, 3
      %s285 = smul.addr %s281, 51
      %s286 = sadd.s32 %s284, %s285
      %s287 = smul.addr %s286, 8
      %s288 = scalar_lea.vmem %s0, %s287
      %p289 = pneg %p52
      %p290 = pneg %p49
      %s291 = sadd.s32 %s22, 1
      %s292 = smul.u32 %s291, 8
      %p293 = scmp.lt.s32.totalorder %s21, 1
      %s294 = scalar_select %p293, %s21, 1
      %p295 = scmp.lt.s32.totalorder %s292, 16
      %s296 = scalar_select %p295, %s292, 16
      %s297 = smul.addr %s296, 3
      %s298 = smul.addr %s294, 51
      %s299 = sadd.s32 %s297, %s298
      %s300 = smul.addr %s299, 8
      %s301 = scalar_lea.vmem %s1, %s300
      %p302 = pneg %p84
      %p303 = pneg %p81
      %p304 = pneg %p105
      %p305 = pneg %p102
      %p306 = pneg %p126
      %p307 = pneg %p123
      %p308 = pneg %p147
      %p309 = pneg %p144
      %p310 = pneg %p168
      %p311 = pneg %p165
      %p312 = pneg %p196
      %p313 = pneg %p193
      %s314 = smul.u32 16, %s22
      %p315 = scmp.lt.s32.totalorder %s21, 1
      %s316 = scalar_select %p315, %s21, 1
      %p317 = scmp.lt.s32.totalorder %s314, 31
      %s318 = scalar_select %p317, %s314, 31
      %s319 = smul.addr %s316, 32
      %s320 = sadd.s32 %s318, %s319
      %s321 = smul.addr %s320, 8
      %s322 = scalar_lea.vmem %s6, %s321
      %s323 = smul.u32 8, %s22
      %s324 = ssub.s32 17, %s323
      %p325 = scmp.lt.s32.totalorder %s324, 8
      %s326 = scalar_select %p325, %s324, 8
      %s327 = smul.u32 128, %s326
      %s328 = smul.u32 %s327, 3
      %p329 = scmp.lt.s32.totalorder %s21, 1
      %s330 = scalar_select %p329, %s21, 1
      %p331 = scmp.lt.s32.totalorder %s323, 16
      %s332 = scalar_select %p331, %s323, 16
      %s333 = smul.addr %s332, 3
      %s334 = smul.addr %s330, 51
      %s335 = sadd.s32 %s333, %s334
      %s336 = smul.addr %s335, 8
      %s337 = scalar_lea.vmem %s0, %s336
      %s338 = smul.u32 8, %s22
      %s339 = ssub.s32 17, %s338
      %p340 = scmp.lt.s32.totalorder %s339, 8
      %s341 = scalar_select %p340, %s339, 8
      %s342 = smul.u32 128, %s341
      %s343 = smul.u32 %s342, 3
      %s344 = sadd.s32 %s22, 1
      %s345 = smul.u32 %s344, 8
      %p346 = scmp.lt.s32.totalorder %s21, 1
      %s347 = scalar_select %p346, %s21, 1
      %p348 = scmp.lt.s32.totalorder %s345, 16
      %s349 = scalar_select %p348, %s345, 16
      %s350 = smul.addr %s349, 3
      %s351 = smul.addr %s347, 51
      %s352 = sadd.s32 %s350, %s351
      %s353 = smul.addr %s352, 8
      %s354 = scalar_lea.vmem %s1, %s353
      %s355 = sadd.s32 %s22, 1
      %s356 = smul.u32 %s355, 8
      %s357 = smul.u32 16, %s22
      %p358 = scmp.lt.s32.totalorder %s21, 1
      %s359 = scalar_select %p358, %s21, 1
      %p360 = scmp.lt.s32.totalorder %s357, 31
      %s361 = scalar_select %p360, %s357, 31
      %s362 = smul.addr %s359, 32
      %s363 = sadd.s32 %s361, %s362
      %s364 = smul.addr %s363, 8
      %s365 = scalar_lea.vmem %s6, %s364
      %s366 = smul.u32 16, %s22
      %v367 = vld [vmem:[%s2] sm:$0xff]
      %v368 = vld [vmem:[%s2 + $0x8] sm:$0xff]
      %v369 = vld [vmem:[%s337] sm:$0xff]
      %v370 = vld [vmem:[%s337 + $0x8] sm:$0xff]
      %v371 = vld [vmem:[%s337 + $0x18] sm:$0xff]
      %v372 = vld [vmem:[%s337 + $0x20] sm:$0xff]
      %v373 = vld [vmem:[%s337 + $0x30] sm:$0xff]
      %v374 = vld [vmem:[%s337 + $0x38] sm:$0xff]
      %v375 = vld [vmem:[%s337 + $0x48] sm:$0xff]
      %v376 = vld [vmem:[%s337 + $0x50] sm:$0xff]
      %v377 = vld [vmem:[%s337 + $0x60] sm:$0xff]
      %v378 = vld [vmem:[%s337 + $0x68] sm:$0xff]
      %v379 = vld [vmem:[%s337 + $0x78] sm:$0xff]
      %v380 = vld [vmem:[%s337 + $0x80] sm:$0xff]
      %v381 = vld [vmem:[%s337 + $0x90] sm:$0xff]
      %v382 = vld [vmem:[%s337 + $0x98] sm:$0xff]
      %v383 = vld [vmem:[%s337 + $0xa8] sm:$0xff]
      %v384 = vld [vmem:[%s337 + $0xb0] sm:$0xff]
      %vm385 = vcmask 130048
      %v387 = vsel %vm385, %v369, 0
      %v390 = vsel %vm385, %v370, 0
      %v393 = vsel %vm385, %v371, 0
      %v396 = vsel %vm385, %v372, 0
      %v399 = vsel %vm385, %v373, 0
      %v402 = vsel %vm385, %v374, 0
      %v405 = vsel %vm385, %v375, 0
      %v408 = vsel %vm385, %v376, 0
      %v411 = vsel %vm385, %v377, 0
      %v414 = vsel %vm385, %v378, 0
      %v417 = vsel %vm385, %v379, 0
      %v420 = vsel %vm385, %v380, 0
      %v423 = vsel %vm385, %v381, 0
      %v426 = vsel %vm385, %v382, 0
      %v429 = vsel %vm385, %v383, 0
      %v432 = vsel %vm385, %v384, 0
      %434 = vmatprep.subr.mxu0 0.0
      %435 = vmatpush1.msra.mxu0 0.0
      %436 = vmatprep.subr.mxu0 0.0
      %437 = vmatpush1.msra.mxu0 0.0
      %438 = vmatprep.subr.mxu0 0.0
      %439 = vmatpush1.msra.mxu0 0.0
      %440 = vmatprep.subr.mxu0 0.0
      %441 = vmatpush1.msra.mxu0 0.0
      %442 = vmatprep.subr.mxu0 0.0
      %443 = vmatpush1.msra.mxu0 0.0
      %444 = vmatprep.subr.mxu0 0.0
      %445 = vmatpush1.msra.mxu0 0.0
      %446 = vmatprep.subr.mxu0 0.0
      %447 = vmatpush1.msra.mxu0 0.0
      %448 = vmatprep.subr.mxu0 0.0
      %449 = vmatpush1.msra.mxu0 0.0
      %450 = vmatprep.subr.mxu0 0.0
      %451 = vmatpush1.msra.mxu0 0.0
      %452 = vmatprep.subr.mxu0 0.0
      %453 = vmatpush1.msra.mxu0 0.0
      %454 = vmatprep.subr.mxu0 0.0
      %455 = vmatpush1.msra.mxu0 0.0
      %456 = vmatprep.subr.mxu0 0.0
      %457 = vmatpush1.msra.mxu0 0.0
      %458 = vmatprep.subr.mxu0 0.0
      %459 = vmatpush1.msra.mxu0 0.0
      %460 = vmatprep.subr.mxu0 0.0
      %461 = vmatpush1.msra.mxu0 0.0
      %462 = vmatprep.subr.mxu0 0.0
      %463 = vmatpush1.msra.mxu0 %v368
      %464 = vmatprep.subr.mxu0 0.0
      %465 = vmatpush1.msra.mxu0 %v367
      %466 = vmatprep.subr.mxu0 0.0
      %467 = vmatpush2.msra.mxu0 0.0
      %468 = vmatprep.subr.mxu0 0.0
      %469 = vmatpush2.msra.mxu0 0.0
      %470 = vmatprep.subr.mxu0 0.0
      %471 = vmatpush2.msra.mxu0 0.0
      %472 = vmatprep.subr.mxu0 0.0
      %473 = vmatpush2.msra.mxu0 0.0
      %474 = vmatprep.subr.mxu0 0.0
      %475 = vmatpush2.msra.mxu0 0.0
      %476 = vmatprep.subr.mxu0 0.0
      %477 = vmatpush2.msra.mxu0 0.0
      %478 = vmatprep.subr.mxu0 0.0
      %479 = vmatpush2.msra.mxu0 0.0
      %480 = vmatprep.subr.mxu0 0.0
      %481 = vmatpush2.msra.mxu0 0.0
      %482 = vmatprep.subr.mxu0 0.0
      %483 = vmatpush2.msra.mxu0 0.0
      %484 = vmatprep.subr.mxu0 0.0
      %485 = vmatpush2.msra.mxu0 0.0
      %486 = vmatprep.subr.mxu0 0.0
      %487 = vmatpush2.msra.mxu0 0.0
      %488 = vmatprep.subr.mxu0 0.0
      %489 = vmatpush2.msra.mxu0 0.0
      %490 = vmatprep.subr.mxu0 0.0
      %491 = vmatpush2.msra.mxu0 0.0
      %492 = vmatprep.subr.mxu0 0.0
      %493 = vmatpush2.msra.mxu0 0.0
      %494 = vmatprep.subr.mxu0 0.0
      %495 = vmatpush2.msra.mxu0 0.0
      %496 = vmatprep.subr.mxu0 0.0
      %497 = vmatpush2.msra.mxu0 0.0
      %498 = vmatprep.mubr.f32.mxu0 0.0
      %499 = vmatmul.mubr.f32.gmra.mxu0 %v387
      %v500 = vpop.f32.mrf.mxu0
      %v501 = vadd.f32 0.0, %v500
      %v502 = vpop.f32.mrf.mxu0
      %503 = vmatprep.mubr.f32.mxu0 0.0
      %504 = vmatmul.mubr.f32.gmra.mxu0 %v390
      %v505 = vpop.f32.mrf.mxu0
      %v506 = vadd.f32 0.0, %v505
      %v507 = vpop.f32.mrf.mxu0
      %508 = vmatprep.mubr.f32.mxu0 0.0
      %509 = vmatmul.mubr.f32.gmra.mxu0 %v393
      %v510 = vpop.f32.mrf.mxu0
      %v511 = vadd.f32 0.0, %v510
      %v512 = vpop.f32.mrf.mxu0
      %513 = vmatprep.mubr.f32.mxu0 0.0
      %514 = vmatmul.mubr.f32.gmra.mxu0 %v396
      %v515 = vpop.f32.mrf.mxu0
      %v516 = vadd.f32 0.0, %v515
      %v517 = vpop.f32.mrf.mxu0
      %518 = vmatprep.mubr.f32.mxu0 0.0
      %519 = vmatmul.mubr.f32.gmra.mxu0 %v399
      %v520 = vpop.f32.mrf.mxu0
      %v521 = vadd.f32 0.0, %v520
      %v522 = vpop.f32.mrf.mxu0
      %523 = vmatprep.mubr.f32.mxu0 0.0
      %524 = vmatmul.mubr.f32.gmra.mxu0 %v402
      %v525 = vpop.f32.mrf.mxu0
      %v526 = vadd.f32 0.0, %v525
      %v527 = vpop.f32.mrf.mxu0
      %528 = vmatprep.mubr.f32.mxu0 0.0
      %529 = vmatmul.mubr.f32.gmra.mxu0 %v405
      %v530 = vpop.f32.mrf.mxu0
      %v531 = vadd.f32 0.0, %v530
      %v532 = vpop.f32.mrf.mxu0
      %533 = vmatprep.mubr.f32.mxu0 0.0
      %534 = vmatmul.mubr.f32.gmra.mxu0 %v408
      %v535 = vpop.f32.mrf.mxu0
      %v536 = vadd.f32 0.0, %v535
      %v537 = vpop.f32.mrf.mxu0
      %538 = vmatprep.mubr.f32.mxu0 0.0
      %539 = vmatmul.mubr.f32.gmra.mxu0 %v411
      %v540 = vpop.f32.mrf.mxu0
      %v541 = vadd.f32 0.0, %v540
      %v542 = vpop.f32.mrf.mxu0
      %543 = vmatprep.mubr.f32.mxu0 0.0
      %544 = vmatmul.mubr.f32.gmra.mxu0 %v414
      %v545 = vpop.f32.mrf.mxu0
      %v546 = vadd.f32 0.0, %v545
      %v547 = vpop.f32.mrf.mxu0
      %548 = vmatprep.mubr.f32.mxu0 0.0
      %549 = vmatmul.mubr.f32.gmra.mxu0 %v417
      %v550 = vpop.f32.mrf.mxu0
      %v551 = vadd.f32 0.0, %v550
      %v552 = vpop.f32.mrf.mxu0
      %553 = vmatprep.mubr.f32.mxu0 0.0
      %554 = vmatmul.mubr.f32.gmra.mxu0 %v420
      %v555 = vpop.f32.mrf.mxu0
      %v556 = vadd.f32 0.0, %v555
      %v557 = vpop.f32.mrf.mxu0
      %558 = vmatprep.mubr.f32.mxu0 0.0
      %559 = vmatmul.mubr.f32.gmra.mxu0 %v423
      %v560 = vpop.f32.mrf.mxu0
      %v561 = vadd.f32 0.0, %v560
      %v562 = vpop.f32.mrf.mxu0
      %563 = vmatprep.mubr.f32.mxu0 0.0
      %564 = vmatmul.mubr.f32.gmra.mxu0 %v426
      %v565 = vpop.f32.mrf.mxu0
      %v566 = vadd.f32 0.0, %v565
      %v567 = vpop.f32.mrf.mxu0
      %568 = vmatprep.mubr.f32.mxu0 0.0
      %569 = vmatmul.mubr.f32.gmra.mxu0 %v429
      %v570 = vpop.f32.mrf.mxu0
      %v571 = vadd.f32 0.0, %v570
      %v572 = vpop.f32.mrf.mxu0
      %573 = vmatprep.mubr.f32.mxu0 0.0
      %574 = vmatmul.mubr.f32.gmra.mxu0 %v432
      %v575 = vpop.f32.mrf.mxu0
      %v576 = vadd.f32 0.0, %v575
      %v577 = vpop.f32.mrf.mxu0
      %578 = vdwg.mxu0
      %vm579 = vcmask 261120
      %580 = vst.msk [vmem:[#allocation2] sm:$0xff] %vm579, %v501
      %581 = vst.msk [vmem:[#allocation2 + $0x8] sm:$0xff] %vm579, %v506
      %582 = vst.msk [vmem:[#allocation2 + $0x10] sm:$0xff] %vm579, %v511
      %583 = vst.msk [vmem:[#allocation2 + $0x18] sm:$0xff] %vm579, %v516
      %584 = vst.msk [vmem:[#allocation2 + $0x20] sm:$0xff] %vm579, %v521
      %585 = vst.msk [vmem:[#allocation2 + $0x28] sm:$0xff] %vm579, %v526
      %586 = vst.msk [vmem:[#allocation2 + $0x30] sm:$0xff] %vm579, %v531
      %587 = vst.msk [vmem:[#allocation2 + $0x38] sm:$0xff] %vm579, %v536
      %588 = vst.msk [vmem:[#allocation2 + $0x40] sm:$0xff] %vm579, %v541
      %589 = vst.msk [vmem:[#allocation2 + $0x48] sm:$0xff] %vm579, %v546
      %590 = vst.msk [vmem:[#allocation2 + $0x50] sm:$0xff] %vm579, %v551
      %591 = vst.msk [vmem:[#allocation2 + $0x58] sm:$0xff] %vm579, %v556
      %592 = vst.msk [vmem:[#allocation2 + $0x60] sm:$0xff] %vm579, %v561
      %593 = vst.msk [vmem:[#allocation2 + $0x68] sm:$0xff] %vm579, %v566
      %594 = vst.msk [vmem:[#allocation2 + $0x70] sm:$0xff] %vm579, %v571
      %595 = vst.msk [vmem:[#allocation2 + $0x78] sm:$0xff] %vm579, %v576
      %s596 = scalar_lea.vmem %s2, 16
      %v597 = vld [vmem:[%s596] sm:$0xff]
      %v598 = vld [vmem:[%s596 + $0x8] sm:$0xff]
      %v599 = vld [vmem:[%s337 + $0x1] sm:$0xff]
      %v600 = vld [vmem:[%s337 + $0x9] sm:$0xff]
      %v601 = vld [vmem:[%s337 + $0x19] sm:$0xff]
      %v602 = vld [vmem:[%s337 + $0x21] sm:$0xff]
      %v603 = vld [vmem:[%s337 + $0x31] sm:$0xff]
      %v604 = vld [vmem:[%s337 + $0x39] sm:$0xff]
      %v605 = vld [vmem:[%s337 + $0x49] sm:$0xff]
      %v606 = vld [vmem:[%s337 + $0x51] sm:$0xff]
      %v607 = vld [vmem:[%s337 + $0x61] sm:$0xff]
      %v608 = vld [vmem:[%s337 + $0x69] sm:$0xff]
      %v609 = vld [vmem:[%s337 + $0x79] sm:$0xff]
      %v610 = vld [vmem:[%s337 + $0x81] sm:$0xff]
      %v611 = vld [vmem:[%s337 + $0x91] sm:$0xff]
      %v612 = vld [vmem:[%s337 + $0x99] sm:$0xff]
      %v613 = vld [vmem:[%s337 + $0xa9] sm:$0xff]
      %v614 = vld [vmem:[%s337 + $0xb1] sm:$0xff]
      %v616 = vsel %vm385, %v599, 0
      %v619 = vsel %vm385, %v600, 0
      %v622 = vsel %vm385, %v601, 0
      %v625 = vsel %vm385, %v602, 0
      %v628 = vsel %vm385, %v603, 0
      %v631 = vsel %vm385, %v604, 0
      %v634 = vsel %vm385, %v605, 0
      %v637 = vsel %vm385, %v606, 0
      %v640 = vsel %vm385, %v607, 0
      %v643 = vsel %vm385, %v608, 0
      %v646 = vsel %vm385, %v609, 0
      %v649 = vsel %vm385, %v610, 0
      %v652 = vsel %vm385, %v611, 0
      %v655 = vsel %vm385, %v612, 0
      %v658 = vsel %vm385, %v613, 0
      %v661 = vsel %vm385, %v614, 0
      %663 = vmatprep.subr.mxu0 0.0
      %664 = vmatpush1.msra.mxu0 0.0
      %665 = vmatprep.subr.mxu0 0.0
      %666 = vmatpush1.msra.mxu0 0.0
      %667 = vmatprep.subr.mxu0 0.0
      %668 = vmatpush1.msra.mxu0 0.0
      %669 = vmatprep.subr.mxu0 0.0
      %670 = vmatpush1.msra.mxu0 0.0
      %671 = vmatprep.subr.mxu0 0.0
      %672 = vmatpush1.msra.mxu0 0.0
      %673 = vmatprep.subr.mxu0 0.0
      %674 = vmatpush1.msra.mxu0 0.0
      %675 = vmatprep.subr.mxu0 0.0
      %676 = vmatpush1.msra.mxu0 0.0
      %677 = vmatprep.subr.mxu0 0.0
      %678 = vmatpush1.msra.mxu0 0.0
      %679 = vmatprep.subr.mxu0 0.0
      %680 = vmatpush1.msra.mxu0 0.0
      %681 = vmatprep.subr.mxu0 0.0
      %682 = vmatpush1.msra.mxu0 0.0
      %683 = vmatprep.subr.mxu0 0.0
      %684 = vmatpush1.msra.mxu0 0.0
      %685 = vmatprep.subr.mxu0 0.0
      %686 = vmatpush1.msra.mxu0 0.0
      %687 = vmatprep.subr.mxu0 0.0
      %688 = vmatpush1.msra.mxu0 0.0
      %689 = vmatprep.subr.mxu0 0.0
      %690 = vmatpush1.msra.mxu0 0.0
      %691 = vmatprep.subr.mxu0 0.0
      %692 = vmatpush1.msra.mxu0 %v598
      %693 = vmatprep.subr.mxu0 0.0
      %694 = vmatpush1.msra.mxu0 %v597
      %695 = vmatprep.subr.mxu0 0.0
      %696 = vmatpush2.msra.mxu0 0.0
      %697 = vmatprep.subr.mxu0 0.0
      %698 = vmatpush2.msra.mxu0 0.0
      %699 = vmatprep.subr.mxu0 0.0
      %700 = vmatpush2.msra.mxu0 0.0
      %701 = vmatprep.subr.mxu0 0.0
      %702 = vmatpush2.msra.mxu0 0.0
      %703 = vmatprep.subr.mxu0 0.0
      %704 = vmatpush2.msra.mxu0 0.0
      %705 = vmatprep.subr.mxu0 0.0
      %706 = vmatpush2.msra.mxu0 0.0
      %707 = vmatprep.subr.mxu0 0.0
      %708 = vmatpush2.msra.mxu0 0.0
      %709 = vmatprep.subr.mxu0 0.0
      %710 = vmatpush2.msra.mxu0 0.0
      %711 = vmatprep.subr.mxu0 0.0
      %712 = vmatpush2.msra.mxu0 0.0
      %713 = vmatprep.subr.mxu0 0.0
      %714 = vmatpush2.msra.mxu0 0.0
      %715 = vmatprep.subr.mxu0 0.0
      %716 = vmatpush2.msra.mxu0 0.0
      %717 = vmatprep.subr.mxu0 0.0
      %718 = vmatpush2.msra.mxu0 0.0
      %719 = vmatprep.subr.mxu0 0.0
      %720 = vmatpush2.msra.mxu0 0.0
      %721 = vmatprep.subr.mxu0 0.0
      %722 = vmatpush2.msra.mxu0 0.0
      %723 = vmatprep.subr.mxu0 0.0
      %724 = vmatpush2.msra.mxu0 0.0
      %725 = vmatprep.subr.mxu0 0.0
      %726 = vmatpush2.msra.mxu0 0.0
      %727 = vmatprep.mubr.f32.mxu0 0.0
      %728 = vmatmul.mubr.f32.gmra.mxu0 %v616
      %v729 = vpop.f32.mrf.mxu0
      %v730 = vadd.f32 0.0, %v729
      %v731 = vpop.f32.mrf.mxu0
      %732 = vmatprep.mubr.f32.mxu0 0.0
      %733 = vmatmul.mubr.f32.gmra.mxu0 %v619
      %v734 = vpop.f32.mrf.mxu0
      %v735 = vadd.f32 0.0, %v734
      %v736 = vpop.f32.mrf.mxu0
      %737 = vmatprep.mubr.f32.mxu0 0.0
      %738 = vmatmul.mubr.f32.gmra.mxu0 %v622
      %v739 = vpop.f32.mrf.mxu0
      %v740 = vadd.f32 0.0, %v739
      %v741 = vpop.f32.mrf.mxu0
      %742 = vmatprep.mubr.f32.mxu0 0.0
      %743 = vmatmul.mubr.f32.gmra.mxu0 %v625
      %v744 = vpop.f32.mrf.mxu0
      %v745 = vadd.f32 0.0, %v744
      %v746 = vpop.f32.mrf.mxu0
      %747 = vmatprep.mubr.f32.mxu0 0.0
      %748 = vmatmul.mubr.f32.gmra.mxu0 %v628
      %v749 = vpop.f32.mrf.mxu0
      %v750 = vadd.f32 0.0, %v749
      %v751 = vpop.f32.mrf.mxu0
      %752 = vmatprep.mubr.f32.mxu0 0.0
      %753 = vmatmul.mubr.f32.gmra.mxu0 %v631
      %v754 = vpop.f32.mrf.mxu0
      %v755 = vadd.f32 0.0, %v754
      %v756 = vpop.f32.mrf.mxu0
      %757 = vmatprep.mubr.f32.mxu0 0.0
      %758 = vmatmul.mubr.f32.gmra.mxu0 %v634
      %v759 = vpop.f32.mrf.mxu0
      %v760 = vadd.f32 0.0, %v759
      %v761 = vpop.f32.mrf.mxu0
      %762 = vmatprep.mubr.f32.mxu0 0.0
      %763 = vmatmul.mubr.f32.gmra.mxu0 %v637
      %v764 = vpop.f32.mrf.mxu0
      %v765 = vadd.f32 0.0, %v764
      %v766 = vpop.f32.mrf.mxu0
      %767 = vmatprep.mubr.f32.mxu0 0.0
      %768 = vmatmul.mubr.f32.gmra.mxu0 %v640
      %v769 = vpop.f32.mrf.mxu0
      %v770 = vadd.f32 0.0, %v769
      %v771 = vpop.f32.mrf.mxu0
      %772 = vmatprep.mubr.f32.mxu0 0.0
      %773 = vmatmul.mubr.f32.gmra.mxu0 %v643
      %v774 = vpop.f32.mrf.mxu0
      %v775 = vadd.f32 0.0, %v774
      %v776 = vpop.f32.mrf.mxu0
      %777 = vmatprep.mubr.f32.mxu0 0.0
      %778 = vmatmul.mubr.f32.gmra.mxu0 %v646
      %v779 = vpop.f32.mrf.mxu0
      %v780 = vadd.f32 0.0, %v779
      %v781 = vpop.f32.mrf.mxu0
      %782 = vmatprep.mubr.f32.mxu0 0.0
      %783 = vmatmul.mubr.f32.gmra.mxu0 %v649
      %v784 = vpop.f32.mrf.mxu0
      %v785 = vadd.f32 0.0, %v784
      %v786 = vpop.f32.mrf.mxu0
      %787 = vmatprep.mubr.f32.mxu0 0.0
      %788 = vmatmul.mubr.f32.gmra.mxu0 %v652
      %v789 = vpop.f32.mrf.mxu0
      %v790 = vadd.f32 0.0, %v789
      %v791 = vpop.f32.mrf.mxu0
      %792 = vmatprep.mubr.f32.mxu0 0.0
      %793 = vmatmul.mubr.f32.gmra.mxu0 %v655
      %v794 = vpop.f32.mrf.mxu0
      %v795 = vadd.f32 0.0, %v794
      %v796 = vpop.f32.mrf.mxu0
      %797 = vmatprep.mubr.f32.mxu0 0.0
      %798 = vmatmul.mubr.f32.gmra.mxu0 %v658
      %v799 = vpop.f32.mrf.mxu0
      %v800 = vadd.f32 0.0, %v799
      %v801 = vpop.f32.mrf.mxu0
      %802 = vmatprep.mubr.f32.mxu0 0.0
      %803 = vmatmul.mubr.f32.gmra.mxu0 %v661
      %v804 = vpop.f32.mrf.mxu0
      %v805 = vadd.f32 0.0, %v804
      %v806 = vpop.f32.mrf.mxu0
      %807 = vdwg.mxu0
      %v808 = vld [vmem:[#allocation2] sm:$0xff]
      %v809 = vld [vmem:[#allocation2 + $0x8] sm:$0xff]
      %v810 = vld [vmem:[#allocation2 + $0x10] sm:$0xff]
      %v811 = vld [vmem:[#allocation2 + $0x18] sm:$0xff]
      %v812 = vld [vmem:[#allocation2 + $0x20] sm:$0xff]
      %v813 = vld [vmem:[#allocation2 + $0x28] sm:$0xff]
      %v814 = vld [vmem:[#allocation2 + $0x30] sm:$0xff]
      %v815 = vld [vmem:[#allocation2 + $0x38] sm:$0xff]
      %v816 = vld [vmem:[#allocation2 + $0x40] sm:$0xff]
      %v817 = vld [vmem:[#allocation2 + $0x48] sm:$0xff]
      %v818 = vld [vmem:[#allocation2 + $0x50] sm:$0xff]
      %v819 = vld [vmem:[#allocation2 + $0x58] sm:$0xff]
      %v820 = vld [vmem:[#allocation2 + $0x60] sm:$0xff]
      %v821 = vld [vmem:[#allocation2 + $0x68] sm:$0xff]
      %v822 = vld [vmem:[#allocation2 + $0x70] sm:$0xff]
      %v823 = vld [vmem:[#allocation2 + $0x78] sm:$0xff]
      %v824 = vadd.f32 %v808, %v730
      %v825 = vadd.f32 %v809, %v735
      %v826 = vadd.f32 %v810, %v740
      %v827 = vadd.f32 %v811, %v745
      %v828 = vadd.f32 %v812, %v750
      %v829 = vadd.f32 %v813, %v755
      %v830 = vadd.f32 %v814, %v760
      %v831 = vadd.f32 %v815, %v765
      %v832 = vadd.f32 %v816, %v770
      %v833 = vadd.f32 %v817, %v775
      %v834 = vadd.f32 %v818, %v780
      %v835 = vadd.f32 %v819, %v785
      %v836 = vadd.f32 %v820, %v790
      %v837 = vadd.f32 %v821, %v795
      %v838 = vadd.f32 %v822, %v800
      %v839 = vadd.f32 %v823, %v805
      %840 = vst.msk [vmem:[#allocation2] sm:$0xff] %vm579, %v824
      %841 = vst.msk [vmem:[#allocation2 + $0x8] sm:$0xff] %vm579, %v825
      %842 = vst.msk [vmem:[#allocation2 + $0x10] sm:$0xff] %vm579, %v826
      %843 = vst.msk [vmem:[#allocation2 + $0x18] sm:$0xff] %vm579, %v827
      %844 = vst.msk [vmem:[#allocation2 + $0x20] sm:$0xff] %vm579, %v828
      %845 = vst.msk [vmem:[#allocation2 + $0x28] sm:$0xff] %vm579, %v829
      %846 = vst.msk [vmem:[#allocation2 + $0x30] sm:$0xff] %vm579, %v830
      %847 = vst.msk [vmem:[#allocation2 + $0x38] sm:$0xff] %vm579, %v831
      %848 = vst.msk [vmem:[#allocation2 + $0x40] sm:$0xff] %vm579, %v832
      %849 = vst.msk [vmem:[#allocation2 + $0x48] sm:$0xff] %vm579, %v833
      %850 = vst.msk [vmem:[#allocation2 + $0x50] sm:$0xff] %vm579, %v834
      %851 = vst.msk [vmem:[#allocation2 + $0x58] sm:$0xff] %vm579, %v835
      %852 = vst.msk [vmem:[#allocation2 + $0x60] sm:$0xff] %vm579, %v836
      %853 = vst.msk [vmem:[#allocation2 + $0x68] sm:$0xff] %vm579, %v837
      %854 = vst.msk [vmem:[#allocation2 + $0x70] sm:$0xff] %vm579, %v838
      %855 = vst.msk [vmem:[#allocation2 + $0x78] sm:$0xff] %vm579, %v839
      %s856 = scalar_lea.vmem %s2, 32
      %v857 = vld [vmem:[%s856] sm:$0xff]
      %v858 = vld [vmem:[%s856 + $0x8] sm:$0xff]
      %s859 = scalar_lea.vmem %s337, 24
      %v860 = vld [vmem:[%s859] sm:$0xff]
      %v861 = vld [vmem:[%s859 + $0x8] sm:$0xff]
      %v862 = vld [vmem:[%s859 + $0x18] sm:$0xff]
      %v863 = vld [vmem:[%s859 + $0x20] sm:$0xff]
      %v864 = vld [vmem:[%s859 + $0x30] sm:$0xff]
      %v865 = vld [vmem:[%s859 + $0x38] sm:$0xff]
      %v866 = vld [vmem:[%s859 + $0x48] sm:$0xff]
      %v867 = vld [vmem:[%s859 + $0x50] sm:$0xff]
      %v868 = vld [vmem:[%s859 + $0x60] sm:$0xff]
      %v869 = vld [vmem:[%s859 + $0x68] sm:$0xff]
      %v870 = vld [vmem:[%s859 + $0x78] sm:$0xff]
      %v871 = vld [vmem:[%s859 + $0x80] sm:$0xff]
      %v872 = vld [vmem:[%s859 + $0x90] sm:$0xff]
      %v873 = vld [vmem:[%s859 + $0x98] sm:$0xff]
      %v875 = vsel %vm385, %v860, 0
      %v878 = vsel %vm385, %v861, 0
      %v881 = vsel %vm385, %v862, 0
      %v884 = vsel %vm385, %v863, 0
      %v887 = vsel %vm385, %v864, 0
      %v890 = vsel %vm385, %v865, 0
      %v893 = vsel %vm385, %v866, 0
      %v896 = vsel %vm385, %v867, 0
      %v899 = vsel %vm385, %v868, 0
      %v902 = vsel %vm385, %v869, 0
      %v905 = vsel %vm385, %v870, 0
      %v908 = vsel %vm385, %v871, 0
      %v911 = vsel %vm385, %v872, 0
      %v914 = vsel %vm385, %v873, 0
      %916 = vmatprep.subr.mxu0 0.0
      %917 = vmatpush1.msra.mxu0 0.0
      %918 = vmatprep.subr.mxu0 0.0
      %919 = vmatpush1.msra.mxu0 0.0
      %920 = vmatprep.subr.mxu0 0.0
      %921 = vmatpush1.msra.mxu0 0.0
      %922 = vmatprep.subr.mxu0 0.0
      %923 = vmatpush1.msra.mxu0 0.0
      %924 = vmatprep.subr.mxu0 0.0
      %925 = vmatpush1.msra.mxu0 0.0
      %926 = vmatprep.subr.mxu0 0.0
      %927 = vmatpush1.msra.mxu0 0.0
      %928 = vmatprep.subr.mxu0 0.0
      %929 = vmatpush1.msra.mxu0 0.0
      %930 = vmatprep.subr.mxu0 0.0
      %931 = vmatpush1.msra.mxu0 0.0
      %932 = vmatprep.subr.mxu0 0.0
      %933 = vmatpush1.msra.mxu0 0.0
      %934 = vmatprep.subr.mxu0 0.0
      %935 = vmatpush1.msra.mxu0 0.0
      %936 = vmatprep.subr.mxu0 0.0
      %937 = vmatpush1.msra.mxu0 0.0
      %938 = vmatprep.subr.mxu0 0.0
      %939 = vmatpush1.msra.mxu0 0.0
      %940 = vmatprep.subr.mxu0 0.0
      %941 = vmatpush1.msra.mxu0 0.0
      %942 = vmatprep.subr.mxu0 0.0
      %943 = vmatpush1.msra.mxu0 0.0
      %944 = vmatprep.subr.mxu0 0.0
      %945 = vmatpush1.msra.mxu0 %v858
      %946 = vmatprep.subr.mxu0 0.0
      %947 = vmatpush1.msra.mxu0 %v857
      %948 = vmatprep.subr.mxu0 0.0
      %949 = vmatpush2.msra.mxu0 0.0
      %950 = vmatprep.subr.mxu0 0.0
      %951 = vmatpush2.msra.mxu0 0.0
      %952 = vmatprep.subr.mxu0 0.0
      %953 = vmatpush2.msra.mxu0 0.0
      %954 = vmatprep.subr.mxu0 0.0
      %955 = vmatpush2.msra.mxu0 0.0
      %956 = vmatprep.subr.mxu0 0.0
      %957 = vmatpush2.msra.mxu0 0.0
      %958 = vmatprep.subr.mxu0 0.0
      %959 = vmatpush2.msra.mxu0 0.0
      %960 = vmatprep.subr.mxu0 0.0
      %961 = vmatpush2.msra.mxu0 0.0
      %962 = vmatprep.subr.mxu0 0.0
      %963 = vmatpush2.msra.mxu0 0.0
      %964 = vmatprep.subr.mxu0 0.0
      %965 = vmatpush2.msra.mxu0 0.0
      %966 = vmatprep.subr.mxu0 0.0
      %967 = vmatpush2.msra.mxu0 0.0
      %968 = vmatprep.subr.mxu0 0.0
      %969 = vmatpush2.msra.mxu0 0.0
      %970 = vmatprep.subr.mxu0 0.0
      %971 = vmatpush2.msra.mxu0 0.0
      %972 = vmatprep.subr.mxu0 0.0
      %973 = vmatpush2.msra.mxu0 0.0
      %974 = vmatprep.subr.mxu0 0.0
      %975 = vmatpush2.msra.mxu0 0.0
      %976 = vmatprep.subr.mxu0 0.0
      %977 = vmatpush2.msra.mxu0 0.0
      %978 = vmatprep.subr.mxu0 0.0
      %979 = vmatpush2.msra.mxu0 0.0
      %980 = vmatprep.mubr.f32.mxu0 0.0
      %981 = vmatmul.mubr.f32.gmra.mxu0 %v875
      %v982 = vpop.f32.mrf.mxu0
      %v983 = vadd.f32 0.0, %v982
      %v984 = vpop.f32.mrf.mxu0
      %985 = vmatprep.mubr.f32.mxu0 0.0
      %986 = vmatmul.mubr.f32.gmra.mxu0 %v878
      %v987 = vpop.f32.mrf.mxu0
      %v988 = vadd.f32 0.0, %v987
      %v989 = vpop.f32.mrf.mxu0
      %990 = vmatprep.mubr.f32.mxu0 0.0
      %991 = vmatmul.mubr.f32.gmra.mxu0 %v881
      %v992 = vpop.f32.mrf.mxu0
      %v993 = vadd.f32 0.0, %v992
      %v994 = vpop.f32.mrf.mxu0
      %995 = vmatprep.mubr.f32.mxu0 0.0
      %996 = vmatmul.mubr.f32.gmra.mxu0 %v884
      %v997 = vpop.f32.mrf.mxu0
      %v998 = vadd.f32 0.0, %v997
      %v999 = vpop.f32.mrf.mxu0
      %1000 = vmatprep.mubr.f32.mxu0 0.0
      %1001 = vmatmul.mubr.f32.gmra.mxu0 %v887
      %v1002 = vpop.f32.mrf.mxu0
      %v1003 = vadd.f32 0.0, %v1002
      %v1004 = vpop.f32.mrf.mxu0
      %1005 = vmatprep.mubr.f32.mxu0 0.0
      %1006 = vmatmul.mubr.f32.gmra.mxu0 %v890
      %v1007 = vpop.f32.mrf.mxu0
      %v1008 = vadd.f32 0.0, %v1007
      %v1009 = vpop.f32.mrf.mxu0
      %1010 = vmatprep.mubr.f32.mxu0 0.0
      %1011 = vmatmul.mubr.f32.gmra.mxu0 %v893
      %v1012 = vpop.f32.mrf.mxu0
      %v1013 = vadd.f32 0.0, %v1012
      %v1014 = vpop.f32.mrf.mxu0
      %1015 = vmatprep.mubr.f32.mxu0 0.0
      %1016 = vmatmul.mubr.f32.gmra.mxu0 %v896
      %v1017 = vpop.f32.mrf.mxu0
      %v1018 = vadd.f32 0.0, %v1017
      %v1019 = vpop.f32.mrf.mxu0
      %1020 = vmatprep.mubr.f32.mxu0 0.0
      %1021 = vmatmul.mubr.f32.gmra.mxu0 %v899
      %v1022 = vpop.f32.mrf.mxu0
      %v1023 = vadd.f32 0.0, %v1022
      %v1024 = vpop.f32.mrf.mxu0
      %1025 = vmatprep.mubr.f32.mxu0 0.0
      %1026 = vmatmul.mubr.f32.gmra.mxu0 %v902
      %v1027 = vpop.f32.mrf.mxu0
      %v1028 = vadd.f32 0.0, %v1027
      %v1029 = vpop.f32.mrf.mxu0
      %1030 = vmatprep.mubr.f32.mxu0 0.0
      %1031 = vmatmul.mubr.f32.gmra.mxu0 %v905
      %v1032 = vpop.f32.mrf.mxu0
      %v1033 = vadd.f32 0.0, %v1032
      %v1034 = vpop.f32.mrf.mxu0
      %1035 = vmatprep.mubr.f32.mxu0 0.0
      %1036 = vmatmul.mubr.f32.gmra.mxu0 %v908
      %v1037 = vpop.f32.mrf.mxu0
      %v1038 = vadd.f32 0.0, %v1037
      %v1039 = vpop.f32.mrf.mxu0
      %1040 = vmatprep.mubr.f32.mxu0 0.0
      %1041 = vmatmul.mubr.f32.gmra.mxu0 %v911
      %v1042 = vpop.f32.mrf.mxu0
      %v1043 = vadd.f32 0.0, %v1042
      %v1044 = vpop.f32.mrf.mxu0
      %1045 = vmatprep.mubr.f32.mxu0 0.0
      %1046 = vmatmul.mubr.f32.gmra.mxu0 %v914
      %v1047 = vpop.f32.mrf.mxu0
      %v1048 = vadd.f32 0.0, %v1047
      %v1049 = vpop.f32.mrf.mxu0
      %1050 = vdwg.mxu0
      %v1051 = vld [vmem:[#allocation2] sm:$0xff]
      %v1052 = vld [vmem:[#allocation2 + $0x8] sm:$0xff]
      %v1053 = vld [vmem:[#allocation2 + $0x10] sm:$0xff]
      %v1054 = vld [vmem:[#allocation2 + $0x18] sm:$0xff]
      %v1055 = vld [vmem:[#allocation2 + $0x20] sm:$0xff]
      %v1056 = vld [vmem:[#allocation2 + $0x28] sm:$0xff]
      %v1057 = vld [vmem:[#allocation2 + $0x30] sm:$0xff]
      %v1058 = vld [vmem:[#allocation2 + $0x38] sm:$0xff]
      %v1059 = vld [vmem:[#allocation2 + $0x40] sm:$0xff]
      %v1060 = vld [vmem:[#allocation2 + $0x48] sm:$0xff]
      %v1061 = vld [vmem:[#allocation2 + $0x50] sm:$0xff]
      %v1062 = vld [vmem:[#allocation2 + $0x58] sm:$0xff]
      %v1063 = vld [vmem:[#allocation2 + $0x60] sm:$0xff]
      %v1064 = vld [vmem:[#allocation2 + $0x68] sm:$0xff]
      %v1065 = vadd.f32 %v1051, %v983
      %v1066 = vadd.f32 %v1052, %v988
      %v1067 = vadd.f32 %v1053, %v993
      %v1068 = vadd.f32 %v1054, %v998
      %v1069 = vadd.f32 %v1055, %v1003
      %v1070 = vadd.f32 %v1056, %v1008
      %v1071 = vadd.f32 %v1057, %v1013
      %v1072 = vadd.f32 %v1058, %v1018
      %v1073 = vadd.f32 %v1059, %v1023
      %v1074 = vadd.f32 %v1060, %v1028
      %v1075 = vadd.f32 %v1061, %v1033
      %v1076 = vadd.f32 %v1062, %v1038
      %v1077 = vadd.f32 %v1063, %v1043
      %v1078 = vadd.f32 %v1064, %v1048
      %1079 = vst.msk [vmem:[#allocation2] sm:$0xff] %vm579, %v1065
      %1080 = vst.msk [vmem:[#allocation2 + $0x8] sm:$0xff] %vm579, %v1066
      %1081 = vst.msk [vmem:[#allocation2 + $0x10] sm:$0xff] %vm579, %v1067
      %1082 = vst.msk [vmem:[#allocation2 + $0x18] sm:$0xff] %vm579, %v1068
      %1083 = vst.msk [vmem:[#allocation2 + $0x20] sm:$0xff] %vm579, %v1069
      %1084 = vst.msk [vmem:[#allocation2 + $0x28] sm:$0xff] %vm579, %v1070
      %1085 = vst.msk [vmem:[#allocation2 + $0x30] sm:$0xff] %vm579, %v1071
      %1086 = vst.msk [vmem:[#allocation2 + $0x38] sm:$0xff] %vm579, %v1072
      %1087 = vst.msk [vmem:[#allocation2 + $0x40] sm:$0xff] %vm579, %v1073
      %1088 = vst.msk [vmem:[#allocation2 + $0x48] sm:$0xff] %vm579, %v1074
      %1089 = vst.msk [vmem:[#allocation2 + $0x50] sm:$0xff] %vm579, %v1075
      %1090 = vst.msk [vmem:[#allocation2 + $0x58] sm:$0xff] %vm579, %v1076
      %1091 = vst.msk [vmem:[#allocation2 + $0x60] sm:$0xff] %vm579, %v1077
      %1092 = vst.msk [vmem:[#allocation2 + $0x68] sm:$0xff] %vm579, %v1078
      %v1093 = vld [vmem:[%s354] sm:$0xff]
      %v1094 = vld [vmem:[%s354 + $0x8] sm:$0xff]
      %v1095 = vld [vmem:[#allocation2 + $0x70] sm:$0xff]
      %v1096 = vld [vmem:[#allocation2 + $0x78] sm:$0xff]
      %v1098 = vsel %vm385, %v1093, 0
      %v1101 = vsel %vm385, %v1094, 0
      %1103 = vmatprep.subr.mxu0 0.0
      %1104 = vmatpush1.msra.mxu0 0.0
      %1105 = vmatprep.subr.mxu0 0.0
      %1106 = vmatpush1.msra.mxu0 0.0
      %1107 = vmatprep.subr.mxu0 0.0
      %1108 = vmatpush1.msra.mxu0 0.0
      %1109 = vmatprep.subr.mxu0 0.0
      %1110 = vmatpush1.msra.mxu0 0.0
      %1111 = vmatprep.subr.mxu0 0.0
      %1112 = vmatpush1.msra.mxu0 0.0
      %1113 = vmatprep.subr.mxu0 0.0
      %1114 = vmatpush1.msra.mxu0 0.0
      %1115 = vmatprep.subr.mxu0 0.0
      %1116 = vmatpush1.msra.mxu0 0.0
      %1117 = vmatprep.subr.mxu0 0.0
      %1118 = vmatpush1.msra.mxu0 0.0
      %1119 = vmatprep.subr.mxu0 0.0
      %1120 = vmatpush1.msra.mxu0 0.0
      %1121 = vmatprep.subr.mxu0 0.0
      %1122 = vmatpush1.msra.mxu0 0.0
      %1123 = vmatprep.subr.mxu0 0.0
      %1124 = vmatpush1.msra.mxu0 0.0
      %1125 = vmatprep.subr.mxu0 0.0
      %1126 = vmatpush1.msra.mxu0 0.0
      %1127 = vmatprep.subr.mxu0 0.0
      %1128 = vmatpush1.msra.mxu0 0.0
      %1129 = vmatprep.subr.mxu0 0.0
      %1130 = vmatpush1.msra.mxu0 0.0
      %1131 = vmatprep.subr.mxu0 0.0
      %1132 = vmatpush1.msra.mxu0 %v858
      %1133 = vmatprep.subr.mxu0 0.0
      %1134 = vmatpush1.msra.mxu0 %v857
      %1135 = vmatprep.subr.mxu0 0.0
      %1136 = vmatpush2.msra.mxu0 0.0
      %1137 = vmatprep.subr.mxu0 0.0
      %1138 = vmatpush2.msra.mxu0 0.0
      %1139 = vmatprep.subr.mxu0 0.0
      %1140 = vmatpush2.msra.mxu0 0.0
      %1141 = vmatprep.subr.mxu0 0.0
      %1142 = vmatpush2.msra.mxu0 0.0
      %1143 = vmatprep.subr.mxu0 0.0
      %1144 = vmatpush2.msra.mxu0 0.0
      %1145 = vmatprep.subr.mxu0 0.0
      %1146 = vmatpush2.msra.mxu0 0.0
      %1147 = vmatprep.subr.mxu0 0.0
      %1148 = vmatpush2.msra.mxu0 0.0
      %1149 = vmatprep.subr.mxu0 0.0
      %1150 = vmatpush2.msra.mxu0 0.0
      %1151 = vmatprep.subr.mxu0 0.0
      %1152 = vmatpush2.msra.mxu0 0.0
      %1153 = vmatprep.subr.mxu0 0.0
      %1154 = vmatpush2.msra.mxu0 0.0
      %1155 = vmatprep.subr.mxu0 0.0
      %1156 = vmatpush2.msra.mxu0 0.0
      %1157 = vmatprep.subr.mxu0 0.0
      %1158 = vmatpush2.msra.mxu0 0.0
      %1159 = vmatprep.subr.mxu0 0.0
      %1160 = vmatpush2.msra.mxu0 0.0
      %1161 = vmatprep.subr.mxu0 0.0
      %1162 = vmatpush2.msra.mxu0 0.0
      %1163 = vmatprep.subr.mxu0 0.0
      %1164 = vmatpush2.msra.mxu0 0.0
      %1165 = vmatprep.subr.mxu0 0.0
      %1166 = vmatpush2.msra.mxu0 0.0
      %1167 = vmatprep.mubr.f32.mxu0 0.0
      %1168 = vmatmul.mubr.f32.gmra.mxu0 %v1098
      %v1169 = vpop.f32.mrf.mxu0
      %v1170 = vadd.f32 0.0, %v1169
      %v1171 = vpop.f32.mrf.mxu0
      %1172 = vmatprep.mubr.f32.mxu0 0.0
      %1173 = vmatmul.mubr.f32.gmra.mxu0 %v1101
      %v1174 = vpop.f32.mrf.mxu0
      %v1175 = vadd.f32 0.0, %v1174
      %v1176 = vpop.f32.mrf.mxu0
      %1177 = vdwg.mxu0
      %v1178 = vadd.f32 %v1095, %v1170
      %v1179 = vadd.f32 %v1096, %v1175
      %1180 = vst.msk [vmem:[#allocation2 + $0x70] sm:$0xff] %vm579, %v1178
      %1181 = vst.msk [vmem:[#allocation2 + $0x78] sm:$0xff] %vm579, %v1179
      %s1182 = scalar_lea.vmem %s2, 48
      %v1183 = vld [vmem:[%s1182] sm:$0xff]
      %v1184 = vld [vmem:[%s1182 + $0x8] sm:$0xff]
      %v1185 = vld [vmem:[%s859 + $0x1] sm:$0xff]
      %v1186 = vld [vmem:[%s859 + $0x9] sm:$0xff]
      %v1187 = vld [vmem:[%s859 + $0x19] sm:$0xff]
      %v1188 = vld [vmem:[%s859 + $0x21] sm:$0xff]
      %v1189 = vld [vmem:[%s859 + $0x31] sm:$0xff]
      %v1190 = vld [vmem:[%s859 + $0x39] sm:$0xff]
      %v1191 = vld [vmem:[%s859 + $0x49] sm:$0xff]
      %v1192 = vld [vmem:[%s859 + $0x51] sm:$0xff]
      %v1193 = vld [vmem:[%s859 + $0x61] sm:$0xff]
      %v1194 = vld [vmem:[%s859 + $0x69] sm:$0xff]
      %v1195 = vld [vmem:[%s859 + $0x79] sm:$0xff]
      %v1196 = vld [vmem:[%s859 + $0x81] sm:$0xff]
      %v1197 = vld [vmem:[%s859 + $0x91] sm:$0xff]
      %v1198 = vld [vmem:[%s859 + $0x99] sm:$0xff]
      %v1200 = vsel %vm385, %v1185, 0
      %v1203 = vsel %vm385, %v1186, 0
      %v1206 = vsel %vm385, %v1187, 0
      %v1209 = vsel %vm385, %v1188, 0
      %v1212 = vsel %vm385, %v1189, 0
      %v1215 = vsel %vm385, %v1190, 0
      %v1218 = vsel %vm385, %v1191, 0
      %v1221 = vsel %vm385, %v1192, 0
      %v1224 = vsel %vm385, %v1193, 0
      %v1227 = vsel %vm385, %v1194, 0
      %v1230 = vsel %vm385, %v1195, 0
      %v1233 = vsel %vm385, %v1196, 0
      %v1236 = vsel %vm385, %v1197, 0
      %v1239 = vsel %vm385, %v1198, 0
      %1241 = vmatprep.subr.mxu0 0.0
      %1242 = vmatpush1.msra.mxu0 0.0
      %1243 = vmatprep.subr.mxu0 0.0
      %1244 = vmatpush1.msra.mxu0 0.0
      %1245 = vmatprep.subr.mxu0 0.0
      %1246 = vmatpush1.msra.mxu0 0.0
      %1247 = vmatprep.subr.mxu0 0.0
      %1248 = vmatpush1.msra.mxu0 0.0
      %1249 = vmatprep.subr.mxu0 0.0
      %1250 = vmatpush1.msra.mxu0 0.0
      %1251 = vmatprep.subr.mxu0 0.0
      %1252 = vmatpush1.msra.mxu0 0.0
      %1253 = vmatprep.subr.mxu0 0.0
      %1254 = vmatpush1.msra.mxu0 0.0
      %1255 = vmatprep.subr.mxu0 0.0
      %1256 = vmatpush1.msra.mxu0 0.0
      %1257 = vmatprep.subr.mxu0 0.0
      %1258 = vmatpush1.msra.mxu0 0.0
      %1259 = vmatprep.subr.mxu0 0.0
      %1260 = vmatpush1.msra.mxu0 0.0
      %1261 = vmatprep.subr.mxu0 0.0
      %1262 = vmatpush1.msra.mxu0 0.0
      %1263 = vmatprep.subr.mxu0 0.0
      %1264 = vmatpush1.msra.mxu0 0.0
      %1265 = vmatprep.subr.mxu0 0.0
      %1266 = vmatpush1.msra.mxu0 0.0
      %1267 = vmatprep.subr.mxu0 0.0
      %1268 = vmatpush1.msra.mxu0 0.0
      %1269 = vmatprep.subr.mxu0 0.0
      %1270 = vmatpush1.msra.mxu0 %v1184
      %1271 = vmatprep.subr.mxu0 0.0
      %1272 = vmatpush1.msra.mxu0 %v1183
      %1273 = vmatprep.subr.mxu0 0.0
      %1274 = vmatpush2.msra.mxu0 0.0
      %1275 = vmatprep.subr.mxu0 0.0
      %1276 = vmatpush2.msra.mxu0 0.0
      %1277 = vmatprep.subr.mxu0 0.0
      %1278 = vmatpush2.msra.mxu0 0.0
      %1279 = vmatprep.subr.mxu0 0.0
      %1280 = vmatpush2.msra.mxu0 0.0
      %1281 = vmatprep.subr.mxu0 0.0
      %1282 = vmatpush2.msra.mxu0 0.0
      %1283 = vmatprep.subr.mxu0 0.0
      %1284 = vmatpush2.msra.mxu0 0.0
      %1285 = vmatprep.subr.mxu0 0.0
      %1286 = vmatpush2.msra.mxu0 0.0
      %1287 = vmatprep.subr.mxu0 0.0
      %1288 = vmatpush2.msra.mxu0 0.0
      %1289 = vmatprep.subr.mxu0 0.0
      %1290 = vmatpush2.msra.mxu0 0.0
      %1291 = vmatprep.subr.mxu0 0.0
      %1292 = vmatpush2.msra.mxu0 0.0
      %1293 = vmatprep.subr.mxu0 0.0
      %1294 = vmatpush2.msra.mxu0 0.0
      %1295 = vmatprep.subr.mxu0 0.0
      %1296 = vmatpush2.msra.mxu0 0.0
      %1297 = vmatprep.subr.mxu0 0.0
      %1298 = vmatpush2.msra.mxu0 0.0
      %1299 = vmatprep.subr.mxu0 0.0
      %1300 = vmatpush2.msra.mxu0 0.0
      %1301 = vmatprep.subr.mxu0 0.0
      %1302 = vmatpush2.msra.mxu0 0.0
      %1303 = vmatprep.subr.mxu0 0.0
      %1304 = vmatpush2.msra.mxu0 0.0
      %1305 = vmatprep.mubr.f32.mxu0 0.0
      %1306 = vmatmul.mubr.f32.gmra.mxu0 %v1200
      %v1307 = vpop.f32.mrf.mxu0
      %v1308 = vadd.f32 0.0, %v1307
      %v1309 = vpop.f32.mrf.mxu0
      %1310 = vmatprep.mubr.f32.mxu0 0.0
      %1311 = vmatmul.mubr.f32.gmra.mxu0 %v1203
      %v1312 = vpop.f32.mrf.mxu0
      %v1313 = vadd.f32 0.0, %v1312
      %v1314 = vpop.f32.mrf.mxu0
      %1315 = vmatprep.mubr.f32.mxu0 0.0
      %1316 = vmatmul.mubr.f32.gmra.mxu0 %v1206
      %v1317 = vpop.f32.mrf.mxu0
      %v1318 = vadd.f32 0.0, %v1317
      %v1319 = vpop.f32.mrf.mxu0
      %1320 = vmatprep.mubr.f32.mxu0 0.0
      %1321 = vmatmul.mubr.f32.gmra.mxu0 %v1209
      %v1322 = vpop.f32.mrf.mxu0
      %v1323 = vadd.f32 0.0, %v1322
      %v1324 = vpop.f32.mrf.mxu0
      %1325 = vmatprep.mubr.f32.mxu0 0.0
      %1326 = vmatmul.mubr.f32.gmra.mxu0 %v1212
      %v1327 = vpop.f32.mrf.mxu0
      %v1328 = vadd.f32 0.0, %v1327
      %v1329 = vpop.f32.mrf.mxu0
      %1330 = vmatprep.mubr.f32.mxu0 0.0
      %1331 = vmatmul.mubr.f32.gmra.mxu0 %v1215
      %v1332 = vpop.f32.mrf.mxu0
      %v1333 = vadd.f32 0.0, %v1332
      %v1334 = vpop.f32.mrf.mxu0
      %1335 = vmatprep.mubr.f32.mxu0 0.0
      %1336 = vmatmul.mubr.f32.gmra.mxu0 %v1218
      %v1337 = vpop.f32.mrf.mxu0
      %v1338 = vadd.f32 0.0, %v1337
      %v1339 = vpop.f32.mrf.mxu0
      %1340 = vmatprep.mubr.f32.mxu0 0.0
      %1341 = vmatmul.mubr.f32.gmra.mxu0 %v1221
      %v1342 = vpop.f32.mrf.mxu0
      %v1343 = vadd.f32 0.0, %v1342
      %v1344 = vpop.f32.mrf.mxu0
      %1345 = vmatprep.mubr.f32.mxu0 0.0
      %1346 = vmatmul.mubr.f32.gmra.mxu0 %v1224
      %v1347 = vpop.f32.mrf.mxu0
      %v1348 = vadd.f32 0.0, %v1347
      %v1349 = vpop.f32.mrf.mxu0
      %1350 = vmatprep.mubr.f32.mxu0 0.0
      %1351 = vmatmul.mubr.f32.gmra.mxu0 %v1227
      %v1352 = vpop.f32.mrf.mxu0
      %v1353 = vadd.f32 0.0, %v1352
      %v1354 = vpop.f32.mrf.mxu0
      %1355 = vmatprep.mubr.f32.mxu0 0.0
      %1356 = vmatmul.mubr.f32.gmra.mxu0 %v1230
      %v1357 = vpop.f32.mrf.mxu0
      %v1358 = vadd.f32 0.0, %v1357
      %v1359 = vpop.f32.mrf.mxu0
      %1360 = vmatprep.mubr.f32.mxu0 0.0
      %1361 = vmatmul.mubr.f32.gmra.mxu0 %v1233
      %v1362 = vpop.f32.mrf.mxu0
      %v1363 = vadd.f32 0.0, %v1362
      %v1364 = vpop.f32.mrf.mxu0
      %1365 = vmatprep.mubr.f32.mxu0 0.0
      %1366 = vmatmul.mubr.f32.gmra.mxu0 %v1236
      %v1367 = vpop.f32.mrf.mxu0
      %v1368 = vadd.f32 0.0, %v1367
      %v1369 = vpop.f32.mrf.mxu0
      %1370 = vmatprep.mubr.f32.mxu0 0.0
      %1371 = vmatmul.mubr.f32.gmra.mxu0 %v1239
      %v1372 = vpop.f32.mrf.mxu0
      %v1373 = vadd.f32 0.0, %v1372
      %v1374 = vpop.f32.mrf.mxu0
      %1375 = vdwg.mxu0
      %v1376 = vld [vmem:[#allocation2] sm:$0xff]
      %v1377 = vld [vmem:[#allocation2 + $0x8] sm:$0xff]
      %v1378 = vld [vmem:[#allocation2 + $0x10] sm:$0xff]
      %v1379 = vld [vmem:[#allocation2 + $0x18] sm:$0xff]
      %v1380 = vld [vmem:[#allocation2 + $0x20] sm:$0xff]
      %v1381 = vld [vmem:[#allocation2 + $0x28] sm:$0xff]
      %v1382 = vld [vmem:[#allocation2 + $0x30] sm:$0xff]
      %v1383 = vld [vmem:[#allocation2 + $0x38] sm:$0xff]
      %v1384 = vld [vmem:[#allocation2 + $0x40] sm:$0xff]
      %v1385 = vld [vmem:[#allocation2 + $0x48] sm:$0xff]
      %v1386 = vld [vmem:[#allocation2 + $0x50] sm:$0xff]
      %v1387 = vld [vmem:[#allocation2 + $0x58] sm:$0xff]
      %v1388 = vld [vmem:[#allocation2 + $0x60] sm:$0xff]
      %v1389 = vld [vmem:[#allocation2 + $0x68] sm:$0xff]
      %v1390 = vadd.f32 %v1376, %v1308
      %v1391 = vadd.f32 %v1377, %v1313
      %v1392 = vadd.f32 %v1378, %v1318
      %v1393 = vadd.f32 %v1379, %v1323
      %v1394 = vadd.f32 %v1380, %v1328
      %v1395 = vadd.f32 %v1381, %v1333
      %v1396 = vadd.f32 %v1382, %v1338
      %v1397 = vadd.f32 %v1383, %v1343
      %v1398 = vadd.f32 %v1384, %v1348
      %v1399 = vadd.f32 %v1385, %v1353
      %v1400 = vadd.f32 %v1386, %v1358
      %v1401 = vadd.f32 %v1387, %v1363
      %v1402 = vadd.f32 %v1388, %v1368
      %v1403 = vadd.f32 %v1389, %v1373
      %1404 = vst.msk [vmem:[#allocation2] sm:$0xff] %vm579, %v1390
      %1405 = vst.msk [vmem:[#allocation2 + $0x8] sm:$0xff] %vm579, %v1391
      %1406 = vst.msk [vmem:[#allocation2 + $0x10] sm:$0xff] %vm579, %v1392
      %1407 = vst.msk [vmem:[#allocation2 + $0x18] sm:$0xff] %vm579, %v1393
      %1408 = vst.msk [vmem:[#allocation2 + $0x20] sm:$0xff] %vm579, %v1394
      %1409 = vst.msk [vmem:[#allocation2 + $0x28] sm:$0xff] %vm579, %v1395
      %1410 = vst.msk [vmem:[#allocation2 + $0x30] sm:$0xff] %vm579, %v1396
      %1411 = vst.msk [vmem:[#allocation2 + $0x38] sm:$0xff] %vm579, %v1397
      %1412 = vst.msk [vmem:[#allocation2 + $0x40] sm:$0xff] %vm579, %v1398
      %1413 = vst.msk [vmem:[#allocation2 + $0x48] sm:$0xff] %vm579, %v1399
      %1414 = vst.msk [vmem:[#allocation2 + $0x50] sm:$0xff] %vm579, %v1400
      %1415 = vst.msk [vmem:[#allocation2 + $0x58] sm:$0xff] %vm579, %v1401
      %1416 = vst.msk [vmem:[#allocation2 + $0x60] sm:$0xff] %vm579, %v1402
      %1417 = vst.msk [vmem:[#allocation2 + $0x68] sm:$0xff] %vm579, %v1403
      %v1418 = vld [vmem:[%s354 + $0x1] sm:$0xff]
      %v1419 = vld [vmem:[%s354 + $0x9] sm:$0xff]
      %v1420 = vld [vmem:[#allocation2 + $0x70] sm:$0xff]
      %v1421 = vld [vmem:[#allocation2 + $0x78] sm:$0xff]
      %v1423 = vsel %vm385, %v1418, 0
      %v1426 = vsel %vm385, %v1419, 0
      %1428 = vmatprep.subr.mxu0 0.0
      %1429 = vmatpush1.msra.mxu0 0.0
      %1430 = vmatprep.subr.mxu0 0.0
      %1431 = vmatpush1.msra.mxu0 0.0
      %1432 = vmatprep.subr.mxu0 0.0
      %1433 = vmatpush1.msra.mxu0 0.0
      %1434 = vmatprep.subr.mxu0 0.0
      %1435 = vmatpush1.msra.mxu0 0.0
      %1436 = vmatprep.subr.mxu0 0.0
      %1437 = vmatpush1.msra.mxu0 0.0
      %1438 = vmatprep.subr.mxu0 0.0
      %1439 = vmatpush1.msra.mxu0 0.0
      %1440 = vmatprep.subr.mxu0 0.0
      %1441 = vmatpush1.msra.mxu0 0.0
      %1442 = vmatprep.subr.mxu0 0.0
      %1443 = vmatpush1.msra.mxu0 0.0
      %1444 = vmatprep.subr.mxu0 0.0
      %1445 = vmatpush1.msra.mxu0 0.0
      %1446 = vmatprep.subr.mxu0 0.0
      %1447 = vmatpush1.msra.mxu0 0.0
      %1448 = vmatprep.subr.mxu0 0.0
      %1449 = vmatpush1.msra.mxu0 0.0
      %1450 = vmatprep.subr.mxu0 0.0
      %1451 = vmatpush1.msra.mxu0 0.0
      %1452 = vmatprep.subr.mxu0 0.0
      %1453 = vmatpush1.msra.mxu0 0.0
      %1454 = vmatprep.subr.mxu0 0.0
      %1455 = vmatpush1.msra.mxu0 0.0
      %1456 = vmatprep.subr.mxu0 0.0
      %1457 = vmatpush1.msra.mxu0 %v1184
      %1458 = vmatprep.subr.mxu0 0.0
      %1459 = vmatpush1.msra.mxu0 %v1183
      %1460 = vmatprep.subr.mxu0 0.0
      %1461 = vmatpush2.msra.mxu0 0.0
      %1462 = vmatprep.subr.mxu0 0.0
      %1463 = vmatpush2.msra.mxu0 0.0
      %1464 = vmatprep.subr.mxu0 0.0
      %1465 = vmatpush2.msra.mxu0 0.0
      %1466 = vmatprep.subr.mxu0 0.0
      %1467 = vmatpush2.msra.mxu0 0.0
      %1468 = vmatprep.subr.mxu0 0.0
      %1469 = vmatpush2.msra.mxu0 0.0
      %1470 = vmatprep.subr.mxu0 0.0
      %1471 = vmatpush2.msra.mxu0 0.0
      %1472 = vmatprep.subr.mxu0 0.0
      %1473 = vmatpush2.msra.mxu0 0.0
      %1474 = vmatprep.subr.mxu0 0.0
      %1475 = vmatpush2.msra.mxu0 0.0
      %1476 = vmatprep.subr.mxu0 0.0
      %1477 = vmatpush2.msra.mxu0 0.0
      %1478 = vmatprep.subr.mxu0 0.0
      %1479 = vmatpush2.msra.mxu0 0.0
      %1480 = vmatprep.subr.mxu0 0.0
      %1481 = vmatpush2.msra.mxu0 0.0
      %1482 = vmatprep.subr.mxu0 0.0
      %1483 = vmatpush2.msra.mxu0 0.0
      %1484 = vmatprep.subr.mxu0 0.0
      %1485 = vmatpush2.msra.mxu0 0.0
      %1486 = vmatprep.subr.mxu0 0.0
      %1487 = vmatpush2.msra.mxu0 0.0
      %1488 = vmatprep.subr.mxu0 0.0
      %1489 = vmatpush2.msra.mxu0 0.0
      %1490 = vmatprep.subr.mxu0 0.0
      %1491 = vmatpush2.msra.mxu0 0.0
      %1492 = vmatprep.mubr.f32.mxu0 0.0
      %1493 = vmatmul.mubr.f32.gmra.mxu0 %v1423
      %v1494 = vpop.f32.mrf.mxu0
      %v1495 = vadd.f32 0.0, %v1494
      %v1496 = vpop.f32.mrf.mxu0
      %1497 = vmatprep.mubr.f32.mxu0 0.0
      %1498 = vmatmul.mubr.f32.gmra.mxu0 %v1426
      %v1499 = vpop.f32.mrf.mxu0
      %v1500 = vadd.f32 0.0, %v1499
      %v1501 = vpop.f32.mrf.mxu0
      %1502 = vdwg.mxu0
      %v1503 = vadd.f32 %v1420, %v1495
      %v1504 = vadd.f32 %v1421, %v1500
      %1505 = vst.msk [vmem:[#allocation2 + $0x70] sm:$0xff] %vm579, %v1503
      %1506 = vst.msk [vmem:[#allocation2 + $0x78] sm:$0xff] %vm579, %v1504
      %v1507 = vld [vmem:[#allocation2] sm:$0xff]
      %v1508 = vld [vmem:[#allocation2 + $0x8] sm:$0xff]
      %v1509 = vld [vmem:[#allocation2 + $0x10] sm:$0xff]
      %v1510 = vld [vmem:[#allocation2 + $0x18] sm:$0xff]
      %v1511 = vld [vmem:[#allocation2 + $0x20] sm:$0xff]
      %v1512 = vld [vmem:[#allocation2 + $0x28] sm:$0xff]
      %v1513 = vld [vmem:[#allocation2 + $0x30] sm:$0xff]
      %v1514 = vld [vmem:[#allocation2 + $0x38] sm:$0xff]
      %v1515 = vld [vmem:[#allocation2 + $0x40] sm:$0xff]
      %v1516 = vld [vmem:[#allocation2 + $0x48] sm:$0xff]
      %v1517 = vld [vmem:[#allocation2 + $0x50] sm:$0xff]
      %v1518 = vld [vmem:[#allocation2 + $0x58] sm:$0xff]
      %v1519 = vld [vmem:[#allocation2 + $0x60] sm:$0xff]
      %v1520 = vld [vmem:[#allocation2 + $0x68] sm:$0xff]
      %v1521 = vld [vmem:[#allocation2 + $0x70] sm:$0xff]
      %v1522 = vld [vmem:[#allocation2 + $0x78] sm:$0xff]
      %v1523 = vld [vmem:[%s3] sm:$0x1]
      %v1525 = vlaneseq
      %v1526 = vshrl.u32 %v1525, 7
      %v1527 = vsub.s32 0, %v1526
      %v1528 = vrot.slane %v1523, %v1527
      %v1530 = vadd.f32 %v1507, %v1528
      %v1531 = vadd.f32 %v1508, %v1528
      %v1532 = vadd.f32 %v1509, %v1528
      %v1533 = vadd.f32 %v1510, %v1528
      %v1534 = vadd.f32 %v1511, %v1528
      %v1535 = vadd.f32 %v1512, %v1528
      %v1536 = vadd.f32 %v1513, %v1528
      %v1537 = vadd.f32 %v1514, %v1528
      %v1538 = vadd.f32 %v1515, %v1528
      %v1539 = vadd.f32 %v1516, %v1528
      %v1540 = vadd.f32 %v1517, %v1528
      %v1541 = vadd.f32 %v1518, %v1528
      %v1542 = vadd.f32 %v1519, %v1528
      %v1543 = vadd.f32 %v1520, %v1528
      %v1544 = vadd.f32 %v1521, %v1528
      %v1545 = vadd.f32 %v1522, %v1528
      %v1546 = vsel %vm579, %v1530, 0.0
      %1547 = vadd.xlane.f32.xlu0 %v1546
      %v1548 = vpop.xlane.xlu0 %1547
      %v1549 = vsel %vm579, %v1531, 0.0
      %1550 = vadd.xlane.f32.xlu0 %v1549
      %v1551 = vpop.xlane.xlu0 %1550
      %v1552 = vsel %vm579, %v1532, 0.0
      %1553 = vadd.xlane.f32.xlu0 %v1552
      %v1554 = vpop.xlane.xlu0 %1553
      %v1555 = vsel %vm579, %v1533, 0.0
      %1556 = vadd.xlane.f32.xlu0 %v1555
      %v1557 = vpop.xlane.xlu0 %1556
      %v1558 = vsel %vm579, %v1534, 0.0
      %1559 = vadd.xlane.f32.xlu0 %v1558
      %v1560 = vpop.xlane.xlu0 %1559
      %v1561 = vsel %vm579, %v1535, 0.0
      %1562 = vadd.xlane.f32.xlu0 %v1561
      %v1563 = vpop.xlane.xlu0 %1562
      %v1564 = vsel %vm579, %v1536, 0.0
      %1565 = vadd.xlane.f32.xlu0 %v1564
      %v1566 = vpop.xlane.xlu0 %1565
      %v1567 = vsel %vm579, %v1537, 0.0
      %1568 = vadd.xlane.f32.xlu0 %v1567
      %v1569 = vpop.xlane.xlu0 %1568
      %v1570 = vsel %vm579, %v1538, 0.0
      %1571 = vadd.xlane.f32.xlu0 %v1570
      %v1572 = vpop.xlane.xlu0 %1571
      %v1573 = vsel %vm579, %v1539, 0.0
      %1574 = vadd.xlane.f32.xlu0 %v1573
      %v1575 = vpop.xlane.xlu0 %1574
      %v1576 = vsel %vm579, %v1540, 0.0
      %1577 = vadd.xlane.f32.xlu0 %v1576
      %v1578 = vpop.xlane.xlu0 %1577
      %v1579 = vsel %vm579, %v1541, 0.0
      %1580 = vadd.xlane.f32.xlu0 %v1579
      %v1581 = vpop.xlane.xlu0 %1580
      %v1582 = vsel %vm579, %v1542, 0.0
      %1583 = vadd.xlane.f32.xlu0 %v1582
      %v1584 = vpop.xlane.xlu0 %1583
      %v1585 = vsel %vm579, %v1543, 0.0
      %1586 = vadd.xlane.f32.xlu0 %v1585
      %v1587 = vpop.xlane.xlu0 %1586
      %v1588 = vsel %vm579, %v1544, 0.0
      %1589 = vadd.xlane.f32.xlu0 %v1588
      %v1590 = vpop.xlane.xlu0 %1589
      %v1591 = vsel %vm579, %v1545, 0.0
      %1592 = vadd.xlane.f32.xlu0 %v1591
      %v1593 = vpop.xlane.xlu0 %1592
      %v1594 = vmul.f32 %v1548, 0.03125
      %v1595 = vmul.f32 %v1551, 0.03125
      %v1596 = vmul.f32 %v1554, 0.03125
      %v1597 = vmul.f32 %v1557, 0.03125
      %v1598 = vmul.f32 %v1560, 0.03125
      %v1599 = vmul.f32 %v1563, 0.03125
      %v1600 = vmul.f32 %v1566, 0.03125
      %v1601 = vmul.f32 %v1569, 0.03125
      %v1602 = vmul.f32 %v1572, 0.03125
      %v1603 = vmul.f32 %v1575, 0.03125
      %v1604 = vmul.f32 %v1578, 0.03125
      %v1605 = vmul.f32 %v1581, 0.03125
      %v1606 = vmul.f32 %v1584, 0.03125
      %v1607 = vmul.f32 %v1587, 0.03125
      %v1608 = vmul.f32 %v1590, 0.03125
      %v1609 = vmul.f32 %v1593, 0.03125
      %v1610 = vmul.f32 %v1530, %v1530
      %v1611 = vmul.f32 %v1531, %v1531
      %v1612 = vmul.f32 %v1532, %v1532
      %v1613 = vmul.f32 %v1533, %v1533
      %v1614 = vmul.f32 %v1534, %v1534
      %v1615 = vmul.f32 %v1535, %v1535
      %v1616 = vmul.f32 %v1536, %v1536
      %v1617 = vmul.f32 %v1537, %v1537
      %v1618 = vmul.f32 %v1538, %v1538
      %v1619 = vmul.f32 %v1539, %v1539
      %v1620 = vmul.f32 %v1540, %v1540
      %v1621 = vmul.f32 %v1541, %v1541
      %v1622 = vmul.f32 %v1542, %v1542
      %v1623 = vmul.f32 %v1543, %v1543
      %v1624 = vmul.f32 %v1544, %v1544
      %v1625 = vmul.f32 %v1545, %v1545
      %v1626 = vsel %vm579, %v1610, 0.0
      %1627 = vadd.xlane.f32.xlu0 %v1626
      %v1628 = vpop.xlane.xlu0 %1627
      %v1629 = vsel %vm579, %v1611, 0.0
      %1630 = vadd.xlane.f32.xlu0 %v1629
      %v1631 = vpop.xlane.xlu0 %1630
      %v1632 = vsel %vm579, %v1612, 0.0
      %1633 = vadd.xlane.f32.xlu0 %v1632
      %v1634 = vpop.xlane.xlu0 %1633
      %v1635 = vsel %vm579, %v1613, 0.0
      %1636 = vadd.xlane.f32.xlu0 %v1635
      %v1637 = vpop.xlane.xlu0 %1636
      %v1638 = vsel %vm579, %v1614, 0.0
      %1639 = vadd.xlane.f32.xlu0 %v1638
      %v1640 = vpop.xlane.xlu0 %1639
      %v1641 = vsel %vm579, %v1615, 0.0
      %1642 = vadd.xlane.f32.xlu0 %v1641
      %v1643 = vpop.xlane.xlu0 %1642
      %v1644 = vsel %vm579, %v1616, 0.0
      %1645 = vadd.xlane.f32.xlu0 %v1644
      %v1646 = vpop.xlane.xlu0 %1645
      %v1647 = vsel %vm579, %v1617, 0.0
      %1648 = vadd.xlane.f32.xlu0 %v1647
      %v1649 = vpop.xlane.xlu0 %1648
      %v1650 = vsel %vm579, %v1618, 0.0
      %1651 = vadd.xlane.f32.xlu0 %v1650
      %v1652 = vpop.xlane.xlu0 %1651
      %v1653 = vsel %vm579, %v1619, 0.0
      %1654 = vadd.xlane.f32.xlu0 %v1653
      %v1655 = vpop.xlane.xlu0 %1654
      %v1656 = vsel %vm579, %v1620, 0.0
      %1657 = vadd.xlane.f32.xlu0 %v1656
      %v1658 = vpop.xlane.xlu0 %1657
      %v1659 = vsel %vm579, %v1621, 0.0
      %1660 = vadd.xlane.f32.xlu0 %v1659
      %v1661 = vpop.xlane.xlu0 %1660
      %v1662 = vsel %vm579, %v1622, 0.0
      %1663 = vadd.xlane.f32.xlu0 %v1662
      %v1664 = vpop.xlane.xlu0 %1663
      %v1665 = vsel %vm579, %v1623, 0.0
      %1666 = vadd.xlane.f32.xlu0 %v1665
      %v1667 = vpop.xlane.xlu0 %1666
      %v1668 = vsel %vm579, %v1624, 0.0
      %1669 = vadd.xlane.f32.xlu0 %v1668
      %v1670 = vpop.xlane.xlu0 %1669
      %v1671 = vsel %vm579, %v1625, 0.0
      %1672 = vadd.xlane.f32.xlu0 %v1671
      %v1673 = vpop.xlane.xlu0 %1672
      %v1674 = vmul.f32 %v1628, 0.03125
      %v1675 = vmul.f32 %v1631, 0.03125
      %v1676 = vmul.f32 %v1634, 0.03125
      %v1677 = vmul.f32 %v1637, 0.03125
      %v1678 = vmul.f32 %v1640, 0.03125
      %v1679 = vmul.f32 %v1643, 0.03125
      %v1680 = vmul.f32 %v1646, 0.03125
      %v1681 = vmul.f32 %v1649, 0.03125
      %v1682 = vmul.f32 %v1652, 0.03125
      %v1683 = vmul.f32 %v1655, 0.03125
      %v1684 = vmul.f32 %v1658, 0.03125
      %v1685 = vmul.f32 %v1661, 0.03125
      %v1686 = vmul.f32 %v1664, 0.03125
      %v1687 = vmul.f32 %v1667, 0.03125
      %v1688 = vmul.f32 %v1670, 0.03125
      %v1689 = vmul.f32 %v1673, 0.03125
      %v1690 = vmul.f32 %v1594, %v1594
      %v1691 = vmul.f32 %v1595, %v1595
      %v1692 = vmul.f32 %v1596, %v1596
      %v1693 = vmul.f32 %v1597, %v1597
      %v1694 = vmul.f32 %v1598, %v1598
      %v1695 = vmul.f32 %v1599, %v1599
      %v1696 = vmul.f32 %v1600, %v1600
      %v1697 = vmul.f32 %v1601, %v1601
      %v1698 = vmul.f32 %v1602, %v1602
      %v1699 = vmul.f32 %v1603, %v1603
      %v1700 = vmul.f32 %v1604, %v1604
      %v1701 = vmul.f32 %v1605, %v1605
      %v1702 = vmul.f32 %v1606, %v1606
      %v1703 = vmul.f32 %v1607, %v1607
      %v1704 = vmul.f32 %v1608, %v1608
      %v1705 = vmul.f32 %v1609, %v1609
      %v1706 = vsub.f32 %v1674, %v1690
      %v1707 = vsub.f32 %v1675, %v1691
      %v1708 = vsub.f32 %v1676, %v1692
      %v1709 = vsub.f32 %v1677, %v1693
      %v1710 = vsub.f32 %v1678, %v1694
      %v1711 = vsub.f32 %v1679, %v1695
      %v1712 = vsub.f32 %v1680, %v1696
      %v1713 = vsub.f32 %v1681, %v1697
      %v1714 = vsub.f32 %v1682, %v1698
      %v1715 = vsub.f32 %v1683, %v1699
      %v1716 = vsub.f32 %v1684, %v1700
      %v1717 = vsub.f32 %v1685, %v1701
      %v1718 = vsub.f32 %v1686, %v1702
      %v1719 = vsub.f32 %v1687, %v1703
      %v1720 = vsub.f32 %v1688, %v1704
      %v1721 = vsub.f32 %v1689, %v1705
      %v1722 = vsub.f32 %v1530, %v1594
      %v1723 = vsub.f32 %v1531, %v1595
      %v1724 = vsub.f32 %v1532, %v1596
      %v1725 = vsub.f32 %v1533, %v1597
      %v1726 = vsub.f32 %v1534, %v1598
      %v1727 = vsub.f32 %v1535, %v1599
      %v1728 = vsub.f32 %v1536, %v1600
      %v1729 = vsub.f32 %v1537, %v1601
      %v1730 = vsub.f32 %v1538, %v1602
      %v1731 = vsub.f32 %v1539, %v1603
      %v1732 = vsub.f32 %v1540, %v1604
      %v1733 = vsub.f32 %v1541, %v1605
      %v1734 = vsub.f32 %v1542, %v1606
      %v1735 = vsub.f32 %v1543, %v1607
      %v1736 = vsub.f32 %v1544, %v1608
      %v1737 = vsub.f32 %v1545, %v1609
      %v1738 = vadd.f32 %v1706, 1e-05
      %v1739 = vadd.f32 %v1707, 1e-05
      %v1740 = vadd.f32 %v1708, 1e-05
      %v1741 = vadd.f32 %v1709, 1e-05
      %v1742 = vadd.f32 %v1710, 1e-05
      %v1743 = vadd.f32 %v1711, 1e-05
      %v1744 = vadd.f32 %v1712, 1e-05
      %v1745 = vadd.f32 %v1713, 1e-05
      %v1746 = vadd.f32 %v1714, 1e-05
      %v1747 = vadd.f32 %v1715, 1e-05
      %v1748 = vadd.f32 %v1716, 1e-05
      %v1749 = vadd.f32 %v1717, 1e-05
      %v1750 = vadd.f32 %v1718, 1e-05
      %v1751 = vadd.f32 %v1719, 1e-05
      %v1752 = vadd.f32 %v1720, 1e-05
      %v1753 = vadd.f32 %v1721, 1e-05
      %v1754 = vrsqrt.pop %v1738
      %v1755 = vrsqrt.pop %v1739
      %v1756 = vrsqrt.pop %v1740
      %v1757 = vrsqrt.pop %v1741
      %v1758 = vrsqrt.pop %v1742
      %v1759 = vrsqrt.pop %v1743
      %v1760 = vrsqrt.pop %v1744
      %v1761 = vrsqrt.pop %v1745
      %v1762 = vrsqrt.pop %v1746
      %v1763 = vrsqrt.pop %v1747
      %v1764 = vrsqrt.pop %v1748
      %v1765 = vrsqrt.pop %v1749
      %v1766 = vrsqrt.pop %v1750
      %v1767 = vrsqrt.pop %v1751
      %v1768 = vrsqrt.pop %v1752
      %v1769 = vrsqrt.pop %v1753
      %v1770 = vmul.f32 %v1722, %v1754
      %v1771 = vmul.f32 %v1723, %v1755
      %v1772 = vmul.f32 %v1724, %v1756
      %v1773 = vmul.f32 %v1725, %v1757
      %v1774 = vmul.f32 %v1726, %v1758
      %v1775 = vmul.f32 %v1727, %v1759
      %v1776 = vmul.f32 %v1728, %v1760
      %v1777 = vmul.f32 %v1729, %v1761
      %v1778 = vmul.f32 %v1730, %v1762
      %v1779 = vmul.f32 %v1731, %v1763
      %v1780 = vmul.f32 %v1732, %v1764
      %v1781 = vmul.f32 %v1733, %v1765
      %v1782 = vmul.f32 %v1734, %v1766
      %v1783 = vmul.f32 %v1735, %v1767
      %v1784 = vmul.f32 %v1736, %v1768
      %v1785 = vmul.f32 %v1737, %v1769
      %v1786 = vld [vmem:[%s4] sm:$0x1]
      %v1788 = vlaneseq
      %v1789 = vshrl.u32 %v1788, 7
      %v1790 = vsub.s32 0, %v1789
      %v1791 = vrot.slane %v1786, %v1790
      %v1793 = vmul.f32 %v1770, %v1791
      %v1794 = vmul.f32 %v1771, %v1791
      %v1795 = vmul.f32 %v1772, %v1791
      %v1796 = vmul.f32 %v1773, %v1791
      %v1797 = vmul.f32 %v1774, %v1791
      %v1798 = vmul.f32 %v1775, %v1791
      %v1799 = vmul.f32 %v1776, %v1791
      %v1800 = vmul.f32 %v1777, %v1791
      %v1801 = vmul.f32 %v1778, %v1791
      %v1802 = vmul.f32 %v1779, %v1791
      %v1803 = vmul.f32 %v1780, %v1791
      %v1804 = vmul.f32 %v1781, %v1791
      %v1805 = vmul.f32 %v1782, %v1791
      %v1806 = vmul.f32 %v1783, %v1791
      %v1807 = vmul.f32 %v1784, %v1791
      %v1808 = vmul.f32 %v1785, %v1791
      %v1809 = vld [vmem:[%s5] sm:$0x1]
      %v1811 = vlaneseq
      %v1812 = vshrl.u32 %v1811, 7
      %v1813 = vsub.s32 0, %v1812
      %v1814 = vrot.slane %v1809, %v1813
      %v1816 = vadd.f32 %v1793, %v1814
      %v1817 = vadd.f32 %v1794, %v1814
      %v1818 = vadd.f32 %v1795, %v1814
      %v1819 = vadd.f32 %v1796, %v1814
      %v1820 = vadd.f32 %v1797, %v1814
      %v1821 = vadd.f32 %v1798, %v1814
      %v1822 = vadd.f32 %v1799, %v1814
      %v1823 = vadd.f32 %v1800, %v1814
      %v1824 = vadd.f32 %v1801, %v1814
      %v1825 = vadd.f32 %v1802, %v1814
      %v1826 = vadd.f32 %v1803, %v1814
      %v1827 = vadd.f32 %v1804, %v1814
      %v1828 = vadd.f32 %v1805, %v1814
      %v1829 = vadd.f32 %v1806, %v1814
      %v1830 = vadd.f32 %v1807, %v1814
      %v1831 = vadd.f32 %v1808, %v1814
      %1832 = vst.msk [vmem:[%s365] sm:$0xff] %vm579, %v1816
      %1833 = vst.msk [vmem:[%s365 + $0x8] sm:$0xff] %vm579, %v1817
      %1834 = vst.msk [vmem:[%s365 + $0x10] sm:$0xff] %vm579, %v1818
      %1835 = vst.msk [vmem:[%s365 + $0x18] sm:$0xff] %vm579, %v1819
      %1836 = vst.msk [vmem:[%s365 + $0x20] sm:$0xff] %vm579, %v1820
      %1837 = vst.msk [vmem:[%s365 + $0x28] sm:$0xff] %vm579, %v1821
      %1838 = vst.msk [vmem:[%s365 + $0x30] sm:$0xff] %vm579, %v1822
      %1839 = vst.msk [vmem:[%s365 + $0x38] sm:$0xff] %vm579, %v1823
      %1840 = vst.msk [vmem:[%s365 + $0x40] sm:$0xff] %vm579, %v1824
      %1841 = vst.msk [vmem:[%s365 + $0x48] sm:$0xff] %vm579, %v1825
      %1842 = vst.msk [vmem:[%s365 + $0x50] sm:$0xff] %vm579, %v1826
      %1843 = vst.msk [vmem:[%s365 + $0x58] sm:$0xff] %vm579, %v1827
      %1844 = vst.msk [vmem:[%s365 + $0x60] sm:$0xff] %vm579, %v1828
      %1845 = vst.msk [vmem:[%s365 + $0x68] sm:$0xff] %vm579, %v1829
      %1846 = vst.msk [vmem:[%s365 + $0x70] sm:$0xff] %vm579, %v1830
      %1847 = vst.msk [vmem:[%s365 + $0x78] sm:$0xff] %vm579, %v1831
      %s1848 = smul.u32 16, %s22
      %p1849 = scmp.lt.s32.totalorder %s21, 1
      %s1850 = scalar_select %p1849, %s21, 1
      %p1851 = scmp.lt.s32.totalorder %s1848, 31
      %s1852 = scalar_select %p1851, %s1848, 31
      %s1853 = smul.addr %s1850, 32
      %s1854 = sadd.s32 %s1852, %s1853
      %s1855 = smul.addr %s1854, 8
      %s1856 = scalar_lea.vmem %s6, %s1855
      // Predicated region
      $region45: #{tpu_custom_call.1} parent=43 // pred_check
        %p1857 = pneg %p193
      $region46: #{tpu_custom_call.1} parent=43 // pred_check_branch
        %1859 = sbr.rel (%p1857) target = $region48
      $region47: #{tpu_custom_call.1} parent=43 // pred_region
        %s1860 = smul.u32 16, %s22
      $region48: #{tpu_custom_call.1} parent=43 // pred_fallthru
        _
    $region44: #{tpu_custom_call.1} parent=5 // pred_fallthru
      _
    %p1861 = scmp.le.s32.totalorder 2, %s12
    // Predicated region
    $region49: #{tpu_custom_call.1} parent=5 // pred_check
      %p1862 = pneg %p1861
    $region50: #{tpu_custom_call.1} parent=5 // pred_check_branch
      %1864 = sbr.rel (%p1862) target = $region52
    $region51: #{tpu_custom_call.1} parent=5 // pred_region
      %s1865 = ssub.s32 %s12, 2
      // Predicated region
      $region53: #{tpu_custom_call.1} parent=51 // pred_check
        %p1866 = pneg %p199
      $region54: #{tpu_custom_call.1} parent=51 // pred_check_branch
        %1868 = sbr.rel (%p1866) target = $region56
      $region55: #{tpu_custom_call.1} parent=51 // pred_region
        %s1869 = smul.u32 16, %s24
        %p1870 = scmp.lt.s32.totalorder %s23, 1
        %s1871 = scalar_select %p1870, %s23, 1
        %p1872 = scmp.lt.s32.totalorder %s1869, 31
        %s1873 = scalar_select %p1872, %s1869, 31
        %s1874 = smul.addr %s1871, 32
        %s1875 = sadd.s32 %s1873, %s1874
        %s1876 = smul.addr %s1875, 8
        %s1877 = scalar_lea.vmem %s6, %s1876
      $region56: #{tpu_custom_call.1} parent=51 // pred_fallthru
        _
    $region52: #{tpu_custom_call.1} parent=5 // pred_fallthru
      _
  $region6: #{tpu_custom_call.1} parent=0 // loop_footer
    %s16 = sadd.s32 1, %s12
  $region7: #{tpu_custom_call.1} parent=0 // loop_footer_branch
    %11 = sbr.rel target = $region3
  $region8: #{tpu_custom_call.1} parent=0 // loop_exit
    _

</llo_original>
